<compile_context>
chip_gen: v7x
topology: tpu7x:2x2x1
jax: 0.10.0
libtpu: 0.0.40
codegen_flags: <defaults>
</compile_context>

<pallas_src>
import jax
import jax.numpy as jnp
import numpy as np
from jax.experimental import pallas as pl
from jax.experimental.pallas import tpu as pltpu


def mlpset_kernel(x_ref,
                  w1p_ref, b1p_ref, w2p_ref, b2p_ref,
                  w1r_ref, b1r_ref, w2r_ref, b2r_ref,
                  w1xr_ref, w1xx_ref, b1x_ref, w2x_ref, b2x_ref,
                  out_ref):
    Bt, S, D_in = x_ref.shape
    x2 = x_ref[...].reshape(Bt * S, D_in)            # flatten batch tile into MXU rows

    # --- psi MLP (pointwise over all Bt*S rows) ---
    h = jnp.maximum(
        jnp.dot(x2, w1p_ref[...], preferred_element_type=jnp.float32) + b1p_ref[...],
        0.0)
    psi = jnp.dot(h, w2p_ref[...], preferred_element_type=jnp.float32) + b2p_ref[...]
    D_psi = psi.shape[-1]

    # --- running mean over the sequence axis ---
    # cumsum via a lower-triangular ones matmul (MXU), batched over the Bt tile.
    # L and the 1/position scaling are generated in-kernel (VPU iota work).
    row = jax.lax.broadcasted_iota(jnp.int32, (S, S), 0)
    col = jax.lax.broadcasted_iota(jnp.int32, (S, S), 1)
    L = (row >= col).astype(jnp.float32)                              # (S, S)
    pos = jax.lax.broadcasted_iota(jnp.int32, (S, 1), 0).astype(jnp.float32)
    inv = (1.0 / (pos + 1.0)).reshape(1, S, 1)                        # (1, S, 1)

    psi3 = psi.reshape(Bt, S, D_psi)
    Lb = jnp.broadcast_to(L, (Bt, S, S))
    # batched matmul: cs[b, s, d] = sum_t L[s, t] * psi[b, t, d]
    cs = jax.lax.dot_general(Lb, psi3,
                             dimension_numbers=(((2,), (1,)), ((0,), (0,))),
                             preferred_element_type=jnp.float32)      # (Bt, S, D_psi)
    psi_mean = (cs * inv).reshape(Bt * S, D_psi)

    # --- rho MLP (pointwise over all Bt*S rows) ---
    h = jnp.maximum(
        jnp.dot(psi_mean, w1r_ref[...], preferred_element_type=jnp.float32)
        + b1r_ref[...], 0.0)
    rho = jnp.dot(h, w2r_ref[...], preferred_element_type=jnp.float32) + b2r_ref[...]

    # --- xi MLP, concat-free ---
    # Original: cat = [rho[:, :-1], x[:, 1:, :-1]].  Here: shift x rows up by
    # one (row r -> x row r+1) and sum two matmuls; the split weight w1xx has a
    # zero row for the dropped last x feature.  Row s = S-1 of every batch
    # element is garbage and is dropped by the wrapper slice.
    x_shift = jnp.concatenate([x2[1:, :], x2[:1, :]], axis=0)         # row r -> x2[r+1]
    h = jnp.maximum(
        jnp.dot(rho, w1xr_ref[...], preferred_element_type=jnp.float32)
        + jnp.dot(x_shift, w1xx_ref[...], preferred_element_type=jnp.float32)
        + b1x_ref[...], 0.0)
    out = jnp.dot(h, w2x_ref[...], preferred_element_type=jnp.float32) + b2x_ref[...]

    out_ref[...] = out.reshape(Bt, S, out.shape[-1])


def mlpset_forward(x, params, *, block_b=8):
    B, S, D_in = x.shape
    hidden = params["w1x"].shape[1]
    D_rho = params["w2r"].shape[1]
    D_out = params["w2x"].shape[1]

    # Split xi's first-layer weight: rows acting on rho, and rows acting on
    # x[..., :-1] zero-padded to D_in (zero row for the dropped feature).
    w1x = params["w1x"]
    w1x_rho = w1x[:D_rho]                                              # (D_rho, hidden)
    w1x_x = jnp.concatenate(
        [w1x[D_rho:], jnp.zeros((1, hidden), w1x.dtype)], axis=0)      # (D_in, hidden)

    # Batch tiling (pad B up to a multiple of Bt; padded rows are dropped).
    Bt = min(block_b, B)
    B_pad = ((B + Bt - 1) // Bt) * Bt
    if B_pad != B:
        x = jnp.concatenate(
            [x, jnp.zeros((B_pad - B, S, D_in), x.dtype)], axis=0)

    weights = [params["w1p"], params["b1p"], params["w2p"], params["b2p"],
               params["w1r"], params["b1r"], params["w2r"], params["b2r"],
               w1x_rho, w1x_x, params["b1x"], params["w2x"], params["b2x"]]

    def wspec(a):
        return pl.BlockSpec(a.shape, lambda b, _nd=a.ndim: (0,) * _nd)

    out = pl.pallas_call(
        mlpset_kernel,
        out_shape=jax.ShapeDtypeStruct((B_pad, S, D_out), jnp.float32),
        grid=(B_pad // Bt,),
        in_specs=[pl.BlockSpec((Bt, S, D_in), lambda b: (b, 0, 0))]
                 + [wspec(a) for a in weights],
        out_specs=pl.BlockSpec((Bt, S, D_out), lambda b: (b, 0, 0)),
        compiler_params=pltpu.CompilerParams(
            dimension_semantics=("parallel",),
            vmem_limit_bytes=32 * 1024 * 1024),
    )(x, *weights)

    # Drop padded batch rows and the invalid last sequence row.
    return out[:B, :S - 1, :]


def mlpset_reference(x, params):
    """Pure-JAX reference mirroring the PyTorch forward."""
    B, S, D_in = x.shape

    def mlp(v, w1, b1, w2, b2):
        return jnp.maximum(v @ w1 + b1, 0.0) @ w2 + b2

    psi = mlp(x.reshape(-1, D_in), params["w1p"], params["b1p"],
              params["w2p"], params["b2p"]).reshape(B, S, -1)
    cs = jnp.cumsum(psi, axis=1)
    idx = jnp.arange(1, S + 1, dtype=jnp.float32).reshape(1, -1, 1)
    mean = cs / idx
    rho = mlp(mean.reshape(-1, psi.shape[-1]), params["w1r"], params["b1r"],
              params["w2r"], params["b2r"]).reshape(B, S, -1)
    cat = jnp.concatenate([rho[:, :-1], x[:, 1:, :-1]], axis=-1)
    out = mlp(cat.reshape(-1, cat.shape[-1]), params["w1x"], params["b1x"],
              params["w2x"], params["b2x"]).reshape(B, S - 1, -1)
    return out


def init_params(key, d_in, d_psi, d_rho, d_out, hidden):
    ks = jax.random.split(key, 6)
    d_cat = d_rho + d_in - 1

    def lin(k, fan_in, fan_out):
        w = jax.random.normal(k, (fan_in, fan_out), jnp.float32) * (1.0 / np.sqrt(fan_in))
        b = jnp.zeros((1, fan_out), jnp.float32) + 0.01
        return w, b

    w1p, b1p = lin(ks[0], d_in, hidden)
    w2p, b2p = lin(ks[1], hidden, d_psi)
    w1r, b1r = lin(ks[2], d_psi, hidden)
    w2r, b2r = lin(ks[3], hidden, d_rho)
    w1x, b1x = lin(ks[4], d_cat, hidden)
    w2x, b2x = lin(ks[5], hidden, d_out)
    return dict(w1p=w1p, b1p=b1p, w2p=w2p, b2p=b2p,
                w1r=w1r, b1r=b1r, w2r=w2r, b2r=b2r,
                w1x=w1x, b1x=b1x, w2x=w2x, b2x=b2x)


if __name__ == "__main__":
    B, S, D_in = 16, 8, 4
    D_psi, D_rho, D_out, HIDDEN = 16, 8, 4, 32

    key = jax.random.PRNGKey(0)
    k_x, k_p = jax.random.split(key)
    x = jax.random.normal(k_x, (B, S, D_in), jnp.float32)
    params = init_params(k_p, D_in, D_psi, D_rho, D_out, HIDDEN)

    out = mlpset_forward(x, params, block_b=8)
    out = jax.block_until_ready(out)

    ref = mlpset_reference(x, params)
    np.testing.assert_allclose(np.asarray(out), np.asarray(ref), rtol=1e-5, atol=1e-5)

    print("KERNEL_OK")
</pallas_src>

<mosaic_0001>
module attributes {stable_mosaic.version = 11 : i64} {
  func.func @mlpset_kernel(%arg0: i32, %arg1: memref<8x8x4xf32, #tpu.memory_space<vmem>>, %arg2: memref<4x32xf32, #tpu.memory_space<vmem>>, %arg3: memref<1x32xf32, #tpu.memory_space<vmem>>, %arg4: memref<32x16xf32, #tpu.memory_space<vmem>>, %arg5: memref<1x16xf32, #tpu.memory_space<vmem>>, %arg6: memref<16x32xf32, #tpu.memory_space<vmem>>, %arg7: memref<1x32xf32, #tpu.memory_space<vmem>>, %arg8: memref<32x8xf32, #tpu.memory_space<vmem>>, %arg9: memref<1x8xf32, #tpu.memory_space<vmem>>, %arg10: memref<8x32xf32, #tpu.memory_space<vmem>>, %arg11: memref<4x32xf32, #tpu.memory_space<vmem>>, %arg12: memref<1x32xf32, #tpu.memory_space<vmem>>, %arg13: memref<32x4xf32, #tpu.memory_space<vmem>>, %arg14: memref<1x4xf32, #tpu.memory_space<vmem>>, %arg15: memref<8x8x4xf32, #tpu.memory_space<vmem>>) attributes {dimension_semantics = [#tpu.dimension_semantics<parallel>], iteration_bounds = array<i64: 2>, scalar_prefetch = 0 : i64, scratch_operands = 0 : i64, tpu.core_type = #tpu.core_type<tc>, window_params = [{transform_indices = @transform_0, window_bounds = array<i64: 8, 8, 4>}, {pipeline_mode = #tpu.pipeline_mode<synchronous>, transform_indices = @transform_1, window_bounds = array<i64: 4, 32>}, {pipeline_mode = #tpu.pipeline_mode<synchronous>, transform_indices = @transform_2, window_bounds = array<i64: 1, 32>}, {pipeline_mode = #tpu.pipeline_mode<synchronous>, transform_indices = @transform_3, window_bounds = array<i64: 32, 16>}, {pipeline_mode = #tpu.pipeline_mode<synchronous>, transform_indices = @transform_4, window_bounds = array<i64: 1, 16>}, {pipeline_mode = #tpu.pipeline_mode<synchronous>, transform_indices = @transform_5, window_bounds = array<i64: 16, 32>}, {pipeline_mode = #tpu.pipeline_mode<synchronous>, transform_indices = @transform_6, window_bounds = array<i64: 1, 32>}, {pipeline_mode = #tpu.pipeline_mode<synchronous>, transform_indices = @transform_7, window_bounds = array<i64: 32, 8>}, {pipeline_mode = #tpu.pipeline_mode<synchronous>, transform_indices = @transform_8, window_bounds = array<i64: 1, 8>}, {pipeline_mode = #tpu.pipeline_mode<synchronous>, transform_indices = @transform_9, window_bounds = array<i64: 8, 32>}, {pipeline_mode = #tpu.pipeline_mode<synchronous>, transform_indices = @transform_10, window_bounds = array<i64: 4, 32>}, {pipeline_mode = #tpu.pipeline_mode<synchronous>, transform_indices = @transform_11, window_bounds = array<i64: 1, 32>}, {pipeline_mode = #tpu.pipeline_mode<synchronous>, transform_indices = @transform_12, window_bounds = array<i64: 32, 4>}, {pipeline_mode = #tpu.pipeline_mode<synchronous>, transform_indices = @transform_13, window_bounds = array<i64: 1, 4>}, {transform_indices = @transform_14, window_bounds = array<i64: 8, 8, 4>}]} {
    %c0 = arith.constant 0 : index
    %c0_0 = arith.constant 0 : index
    %c0_1 = arith.constant 0 : index
    %0 = vector.load %arg1[%c0, %c0_0, %c0_1] : memref<8x8x4xf32, #tpu.memory_space<vmem>>, vector<8x8x4xf32>
    %1 = vector.shape_cast %0 : vector<8x8x4xf32> to vector<64x4xf32>
    %c0_2 = arith.constant 0 : index
    %c0_3 = arith.constant 0 : index
    %2 = vector.load %arg2[%c0_2, %c0_3] : memref<4x32xf32, #tpu.memory_space<vmem>>, vector<4x32xf32>
    %cst = arith.constant dense<0.000000e+00> : vector<64x32xf32>
    %3 = tpu.matmul %1, %2, %cst {dimension_numbers = #tpu.dot_dimension_numbers<[1], [0], [0], [1], [0, 0, 1, 1], [], []>} : vector<64x4xf32>, vector<4x32xf32>, vector<64x32xf32> -> vector<64x32xf32>
    %c0_4 = arith.constant 0 : index
    %c0_5 = arith.constant 0 : index
    %4 = vector.load %arg3[%c0_4, %c0_5] : memref<1x32xf32, #tpu.memory_space<vmem>>, vector<1x32xf32>
    %5 = vector.broadcast %4 : vector<1x32xf32> to vector<64x32xf32>
    %6 = arith.addf %3, %5 : vector<64x32xf32>
    %cst_6 = arith.constant 0.000000e+00 : f32
    %7 = vector.broadcast %cst_6 : f32 to vector<64x32xf32>
    %8 = arith.maximumf %6, %7 : vector<64x32xf32>
    %c0_7 = arith.constant 0 : index
    %c0_8 = arith.constant 0 : index
    %9 = vector.load %arg4[%c0_7, %c0_8] : memref<32x16xf32, #tpu.memory_space<vmem>>, vector<32x16xf32>
    %cst_9 = arith.constant dense<0.000000e+00> : vector<64x16xf32>
    %10 = tpu.matmul %8, %9, %cst_9 {dimension_numbers = #tpu.dot_dimension_numbers<[1], [0], [0], [1], [0, 0, 1, 1], [], []>} : vector<64x32xf32>, vector<32x16xf32>, vector<64x16xf32> -> vector<64x16xf32>
    %c0_10 = arith.constant 0 : index
    %c0_11 = arith.constant 0 : index
    %11 = vector.load %arg5[%c0_10, %c0_11] : memref<1x16xf32, #tpu.memory_space<vmem>>, vector<1x16xf32>
    %12 = vector.broadcast %11 : vector<1x16xf32> to vector<64x16xf32>
    %13 = arith.addf %10, %12 : vector<64x16xf32>
    %14 = tpu.iota {dimensions = array<i32: 0>} : vector<8x8xi32>
    %15 = tpu.iota {dimensions = array<i32: 1>} : vector<8x8xi32>
    %16 = arith.cmpi sge, %14, %15 : vector<8x8xi32>
    %17 = arith.extui %16 : vector<8x8xi1> to vector<8x8xi32>
    %18 = arith.sitofp %17 : vector<8x8xi32> to vector<8x8xf32>
    %19 = tpu.iota {dimensions = array<i32: 0>} : vector<8x1xi32>
    %20 = arith.sitofp %19 : vector<8x1xi32> to vector<8x1xf32>
    %cst_12 = arith.constant 1.000000e+00 : f32
    %21 = vector.broadcast %cst_12 : f32 to vector<8x1xf32>
    %22 = arith.addf %20, %21 : vector<8x1xf32>
    %cst_13 = arith.constant 1.000000e+00 : f32
    %23 = vector.broadcast %cst_13 : f32 to vector<8x1xf32>
    %24 = arith.divf %23, %22 : vector<8x1xf32>
    %25 = vector.shape_cast %24 : vector<8x1xf32> to vector<1x8x1xf32>
    %26 = vector.shape_cast %13 : vector<64x16xf32> to vector<8x8x16xf32>
    %27 = vector.shape_cast %18 : vector<8x8xf32> to vector<1x8x8xf32>
    %28 = vector.broadcast %27 : vector<1x8x8xf32> to vector<8x8x8xf32>
    %cst_14 = arith.constant dense<0.000000e+00> : vector<8x8x16xf32>
    %29 = tpu.matmul %28, %26, %cst_14 {dimension_numbers = #tpu.dot_dimension_numbers<[2], [1], [1], [2], [0, 0, 0, 1, 1, 2], [0], [0]>} : vector<8x8x8xf32>, vector<8x8x16xf32>, vector<8x8x16xf32> -> vector<8x8x16xf32>
    %30 = vector.broadcast %25 : vector<1x8x1xf32> to vector<8x8x16xf32>
    %31 = arith.mulf %29, %30 : vector<8x8x16xf32>
    %32 = vector.shape_cast %31 : vector<8x8x16xf32> to vector<64x16xf32>
    %c0_15 = arith.constant 0 : index
    %c0_16 = arith.constant 0 : index
    %33 = vector.load %arg6[%c0_15, %c0_16] : memref<16x32xf32, #tpu.memory_space<vmem>>, vector<16x32xf32>
    %cst_17 = arith.constant dense<0.000000e+00> : vector<64x32xf32>
    %34 = tpu.matmul %32, %33, %cst_17 {dimension_numbers = #tpu.dot_dimension_numbers<[1], [0], [0], [1], [0, 0, 1, 1], [], []>} : vector<64x16xf32>, vector<16x32xf32>, vector<64x32xf32> -> vector<64x32xf32>
    %c0_18 = arith.constant 0 : index
    %c0_19 = arith.constant 0 : index
    %35 = vector.load %arg7[%c0_18, %c0_19] : memref<1x32xf32, #tpu.memory_space<vmem>>, vector<1x32xf32>
    %36 = vector.broadcast %35 : vector<1x32xf32> to vector<64x32xf32>
    %37 = arith.addf %34, %36 : vector<64x32xf32>
    %cst_20 = arith.constant 0.000000e+00 : f32
    %38 = vector.broadcast %cst_20 : f32 to vector<64x32xf32>
    %39 = arith.maximumf %37, %38 : vector<64x32xf32>
    %c0_21 = arith.constant 0 : index
    %c0_22 = arith.constant 0 : index
    %40 = vector.load %arg8[%c0_21, %c0_22] : memref<32x8xf32, #tpu.memory_space<vmem>>, vector<32x8xf32>
    %cst_23 = arith.constant dense<0.000000e+00> : vector<64x8xf32>
    %41 = tpu.matmul %39, %40, %cst_23 {dimension_numbers = #tpu.dot_dimension_numbers<[1], [0], [0], [1], [0, 0, 1, 1], [], []>} : vector<64x32xf32>, vector<32x8xf32>, vector<64x8xf32> -> vector<64x8xf32>
    %c0_24 = arith.constant 0 : index
    %c0_25 = arith.constant 0 : index
    %42 = vector.load %arg9[%c0_24, %c0_25] : memref<1x8xf32, #tpu.memory_space<vmem>>, vector<1x8xf32>
    %43 = vector.broadcast %42 : vector<1x8xf32> to vector<64x8xf32>
    %44 = arith.addf %41, %43 : vector<64x8xf32>
    %45 = vector.extract_strided_slice %1 {offsets = [1, 0], sizes = [63, 4], strides = [1, 1]} : vector<64x4xf32> to vector<63x4xf32>
    %46 = vector.extract_strided_slice %1 {offsets = [0, 0], sizes = [1, 4], strides = [1, 1]} : vector<64x4xf32> to vector<1x4xf32>
    %47 = tpu.concatenate %45, %46 in 0 : vector<63x4xf32>, vector<1x4xf32> -> vector<64x4xf32>
    %c0_26 = arith.constant 0 : index
    %c0_27 = arith.constant 0 : index
    %48 = vector.load %arg10[%c0_26, %c0_27] : memref<8x32xf32, #tpu.memory_space<vmem>>, vector<8x32xf32>
    %cst_28 = arith.constant dense<0.000000e+00> : vector<64x32xf32>
    %49 = tpu.matmul %44, %48, %cst_28 {dimension_numbers = #tpu.dot_dimension_numbers<[1], [0], [0], [1], [0, 0, 1, 1], [], []>} : vector<64x8xf32>, vector<8x32xf32>, vector<64x32xf32> -> vector<64x32xf32>
    %c0_29 = arith.constant 0 : index
    %c0_30 = arith.constant 0 : index
    %50 = vector.load %arg11[%c0_29, %c0_30] : memref<4x32xf32, #tpu.memory_space<vmem>>, vector<4x32xf32>
    %cst_31 = arith.constant dense<0.000000e+00> : vector<64x32xf32>
    %51 = tpu.matmul %47, %50, %cst_31 {dimension_numbers = #tpu.dot_dimension_numbers<[1], [0], [0], [1], [0, 0, 1, 1], [], []>} : vector<64x4xf32>, vector<4x32xf32>, vector<64x32xf32> -> vector<64x32xf32>
    %52 = arith.addf %49, %51 : vector<64x32xf32>
    %c0_32 = arith.constant 0 : index
    %c0_33 = arith.constant 0 : index
    %53 = vector.load %arg12[%c0_32, %c0_33] : memref<1x32xf32, #tpu.memory_space<vmem>>, vector<1x32xf32>
    %54 = vector.broadcast %53 : vector<1x32xf32> to vector<64x32xf32>
    %55 = arith.addf %52, %54 : vector<64x32xf32>
    %cst_34 = arith.constant 0.000000e+00 : f32
    %56 = vector.broadcast %cst_34 : f32 to vector<64x32xf32>
    %57 = arith.maximumf %55, %56 : vector<64x32xf32>
    %c0_35 = arith.constant 0 : index
    %c0_36 = arith.constant 0 : index
    %58 = vector.load %arg13[%c0_35, %c0_36] : memref<32x4xf32, #tpu.memory_space<vmem>>, vector<32x4xf32>
    %cst_37 = arith.constant dense<0.000000e+00> : vector<64x4xf32>
    %59 = tpu.matmul %57, %58, %cst_37 {dimension_numbers = #tpu.dot_dimension_numbers<[1], [0], [0], [1], [0, 0, 1, 1], [], []>} : vector<64x32xf32>, vector<32x4xf32>, vector<64x4xf32> -> vector<64x4xf32>
    %c0_38 = arith.constant 0 : index
    %c0_39 = arith.constant 0 : index
    %60 = vector.load %arg14[%c0_38, %c0_39] : memref<1x4xf32, #tpu.memory_space<vmem>>, vector<1x4xf32>
    %61 = vector.broadcast %60 : vector<1x4xf32> to vector<64x4xf32>
    %62 = arith.addf %59, %61 : vector<64x4xf32>
    %63 = vector.shape_cast %62 : vector<64x4xf32> to vector<8x8x4xf32>
    %c0_40 = arith.constant 0 : index
    %c0_41 = arith.constant 0 : index
    %c0_42 = arith.constant 0 : index
    %64 = vector.load %arg15[%c0_40, %c0_41, %c0_42] : memref<8x8x4xf32, #tpu.memory_space<vmem>>, vector<8x8x4xf32>
    tpu.vector_store %arg15[%c0_40, %c0_41, %c0_42], %63 {strides = array<i32>} : memref<8x8x4xf32, #tpu.memory_space<vmem>>, vector<8x8x4xf32>,
    return
  }
  func.func @transform_0(%arg0: i32) -> (i32, i32, i32) {
    %c0_i32 = arith.constant 0 : i32
    %c0_i32_0 = arith.constant 0 : i32
    %c0_i32_1 = arith.constant 0 : i32
    return %arg0, %c0_i32, %c0_i32_0 : i32, i32, i32
  }
  func.func @transform_1(%arg0: i32) -> (i32, i32) {
    %c0_i32 = arith.constant 0 : i32
    %c0_i32_0 = arith.constant 0 : i32
    %c0_i32_1 = arith.constant 0 : i32
    return %c0_i32, %c0_i32_0 : i32, i32
  }
  func.func @transform_2(%arg0: i32) -> (i32, i32) {
    %c0_i32 = arith.constant 0 : i32
    %c0_i32_0 = arith.constant 0 : i32
    %c0_i32_1 = arith.constant 0 : i32
    return %c0_i32, %c0_i32_0 : i32, i32
  }
  func.func @transform_3(%arg0: i32) -> (i32, i32) {
    %c0_i32 = arith.constant 0 : i32
    %c0_i32_0 = arith.constant 0 : i32
    %c0_i32_1 = arith.constant 0 : i32
    return %c0_i32, %c0_i32_0 : i32, i32
  }
  func.func @transform_4(%arg0: i32) -> (i32, i32) {
    %c0_i32 = arith.constant 0 : i32
    %c0_i32_0 = arith.constant 0 : i32
    %c0_i32_1 = arith.constant 0 : i32
    return %c0_i32, %c0_i32_0 : i32, i32
  }
  func.func @transform_5(%arg0: i32) -> (i32, i32) {
    %c0_i32 = arith.constant 0 : i32
    %c0_i32_0 = arith.constant 0 : i32
    %c0_i32_1 = arith.constant 0 : i32
    return %c0_i32, %c0_i32_0 : i32, i32
  }
  func.func @transform_6(%arg0: i32) -> (i32, i32) {
    %c0_i32 = arith.constant 0 : i32
    %c0_i32_0 = arith.constant 0 : i32
    %c0_i32_1 = arith.constant 0 : i32
    return %c0_i32, %c0_i32_0 : i32, i32
  }
  func.func @transform_7(%arg0: i32) -> (i32, i32) {
    %c0_i32 = arith.constant 0 : i32
    %c0_i32_0 = arith.constant 0 : i32
    %c0_i32_1 = arith.constant 0 : i32
    return %c0_i32, %c0_i32_0 : i32, i32
  }
  func.func @transform_8(%arg0: i32) -> (i32, i32) {
    %c0_i32 = arith.constant 0 : i32
    %c0_i32_0 = arith.constant 0 : i32
    %c0_i32_1 = arith.constant 0 : i32
    return %c0_i32, %c0_i32_0 : i32, i32
  }
  func.func @transform_9(%arg0: i32) -> (i32, i32) {
    %c0_i32 = arith.constant 0 : i32
    %c0_i32_0 = arith.constant 0 : i32
    %c0_i32_1 = arith.constant 0 : i32
    return %c0_i32, %c0_i32_0 : i32, i32
  }
  func.func @transform_10(%arg0: i32) -> (i32, i32) {
    %c0_i32 = arith.constant 0 : i32
    %c0_i32_0 = arith.constant 0 : i32
    %c0_i32_1 = arith.constant 0 : i32
    return %c0_i32, %c0_i32_0 : i32, i32
  }
  func.func @transform_11(%arg0: i32) -> (i32, i32) {
    %c0_i32 = arith.constant 0 : i32
    %c0_i32_0 = arith.constant 0 : i32
    %c0_i32_1 = arith.constant 0 : i32
    return %c0_i32, %c0_i32_0 : i32, i32
  }
  func.func @transform_12(%arg0: i32) -> (i32, i32) {
    %c0_i32 = arith.constant 0 : i32
    %c0_i32_0 = arith.constant 0 : i32
    %c0_i32_1 = arith.constant 0 : i32
    return %c0_i32, %c0_i32_0 : i32, i32
  }
  func.func @transform_13(%arg0: i32) -> (i32, i32) {
    %c0_i32 = arith.constant 0 : i32
    %c0_i32_0 = arith.constant 0 : i32
    %c0_i32_1 = arith.constant 0 : i32
    return %c0_i32, %c0_i32_0 : i32, i32
  }
  func.func @transform_14(%arg0: i32) -> (i32, i32, i32) {
    %c0_i32 = arith.constant 0 : i32
    %c0_i32_0 = arith.constant 0 : i32
    %c0_i32_1 = arith.constant 0 : i32
    return %arg0, %c0_i32, %c0_i32_0 : i32, i32, i32
  }
}

</mosaic_0001>

<llo_original>
// kernel: tpu_custom_call.1
$region0: #{tpu_custom_call.1}
  #allocation0 [shape = 'u32[]', space=smem, size = 0x4, offset = 0x4, fixed_abs, tag = 'smem constant byte address 0x4 - core index']
  #allocation1 [shape = 'u32[144,128]{1,0:T(1,128)}', space=vmem, size = 0x12000, scoped, tag = 'internal scratch']
  %s0 = inlined_call_operand.vmem [shape: f32[16,8,4], index: 0, kind: input, shape index: {}]
  %s1 = inlined_call_operand.vmem [shape: f32[4,32], index: 1, kind: input, shape index: {}]
  %s2 = inlined_call_operand.vmem [shape: f32[1,32], index: 2, kind: input, shape index: {}]
  %s3 = inlined_call_operand.vmem [shape: f32[32,16], index: 3, kind: input, shape index: {}]
  %s4 = inlined_call_operand.vmem [shape: f32[1,16], index: 4, kind: input, shape index: {}]
  %s5 = inlined_call_operand.vmem [shape: f32[16,32], index: 5, kind: input, shape index: {}]
  %s6 = inlined_call_operand.vmem [shape: f32[1,32], index: 6, kind: input, shape index: {}]
  %s7 = inlined_call_operand.vmem [shape: f32[32,8], index: 7, kind: input, shape index: {}]
  %s8 = inlined_call_operand.vmem [shape: f32[1,8], index: 8, kind: input, shape index: {}]
  %s9 = inlined_call_operand.vmem [shape: f32[8,32], index: 9, kind: input, shape index: {}]
  %s10 = inlined_call_operand.vmem [shape: f32[4,32], index: 10, kind: input, shape index: {}]
  %s11 = inlined_call_operand.vmem [shape: f32[1,32], index: 11, kind: input, shape index: {}]
  %s12 = inlined_call_operand.vmem [shape: f32[32,4], index: 12, kind: input, shape index: {}]
  %s13 = inlined_call_operand.vmem [shape: f32[1,4], index: 13, kind: input, shape index: {}]
  %s14 = inlined_call_operand.vmem [shape: f32[16,8,4], index: 14, kind: output, shape index: {}]
  %s15 = sld [smem:[#allocation0]]
  $region89: #{tpu_custom_call.1} parent=0
    _
  %s17 = ssub.s32 1, %s15
  %s18 = scalar_select 0, %s17, %s15
  loop: start=0, step=1, limit=4
  $region2: #{tpu_custom_call.1} parent=0 // loop_pre_header
    _
  $region3: #{tpu_custom_call.1} parent=0 // loop_header
    %s20 = sphi 0, %s24
    %p21 = scmp.ge.s32.totalorder %s20, 4
    %s30 = sphi 0, %s32
    %s33 = sphi 0, %s30
    %s34 = sphi 0, %s33
    %s50 = sphi 0, %s34
    %s54 = sphi 0, %s54
    %s56 = sphi 0, %s54
    %s57 = sphi 0, %s56
    %s71 = sphi 0, %s57
    %s75 = sphi 0, %s75
    %s77 = sphi 0, %s75
    %s78 = sphi 0, %s77
    %s92 = sphi 0, %s78
    %s96 = sphi 0, %s96
    %s98 = sphi 0, %s96
    %s99 = sphi 0, %s98
    %s113 = sphi 0, %s99
    %s117 = sphi 0, %s117
    %s119 = sphi 0, %s117
    %s120 = sphi 0, %s119
    %s134 = sphi 0, %s120
    %s138 = sphi 0, %s138
    %s140 = sphi 0, %s138
    %s141 = sphi 0, %s140
    %s155 = sphi 0, %s141
    %s159 = sphi 0, %s159
    %s161 = sphi 0, %s159
    %s162 = sphi 0, %s161
    %s176 = sphi 0, %s162
    %s180 = sphi 0, %s180
    %s182 = sphi 0, %s180
    %s183 = sphi 0, %s182
    %s197 = sphi 0, %s183
    %s201 = sphi 0, %s201
    %s203 = sphi 0, %s201
    %s204 = sphi 0, %s203
    %s218 = sphi 0, %s204
    %s222 = sphi 0, %s222
    %s224 = sphi 0, %s222
    %s225 = sphi 0, %s224
    %s239 = sphi 0, %s225
    %s243 = sphi 0, %s243
    %s245 = sphi 0, %s243
    %s246 = sphi 0, %s245
    %s260 = sphi 0, %s246
    %s264 = sphi 0, %s264
    %s266 = sphi 0, %s264
    %s267 = sphi 0, %s266
    %s281 = sphi 0, %s267
    %s285 = sphi 0, %s285
    %s287 = sphi 0, %s285
    %s288 = sphi 0, %s287
    %s302 = sphi 0, %s288
    %s306 = sphi 0, %s306
    %s308 = sphi 0, %s306
    %s309 = sphi 0, %s308
    %s323 = sphi 0, %s309
    %s329 = sphi 0, %s331
    %s332 = sphi 0, %s329
    %s333 = sphi 0, %s332
    %s349 = sphi 0, %s333
  $region4: #{tpu_custom_call.1} parent=0 // loop_header_branch
    %23 = sbr.rel (%p21) target = $region8
  $region5: #{tpu_custom_call.1} parent=0 // loop_body
    %s25 = ssub.s32 %s20, 1
    %s26 = ssub.s32 %s20, 2
    %s27 = sadd.s32 %s20, 1
    %s28 = ssub.s32 %s20, %s27
    %p29 = scmp.eq.s32.totalorder %s28, 0
    %s31 = sadd.s32 %s30, 1
    %s32 = scalar_select %p29, %s30, %s31
    %p35 = pneg %p29
    %p36 = scmp.eq.s32.totalorder %s20, 1
    %p37 = por %p35, %p36
    %p38 = scmp.ne.s32.totalorder %s30, %s33
    %p39 = scmp.eq.s32.totalorder %s20, 0
    %p40 = por %p38, %p39
    %p41 = scmp.ne.s32.totalorder %s30, %s33
    %p42 = scmp.eq.s32.totalorder %s25, 1
    %p43 = por %p41, %p42
    %p44 = scmp.ne.s32.totalorder %s33, %s34
    %p45 = scmp.eq.s32.totalorder %s25, 0
    %p46 = por %p44, %p45
    %p47 = scmp.ne.s32.totalorder %s33, %s34
    %p48 = scmp.eq.s32.totalorder %s26, 1
    %p49 = por %p47, %p48
    %p51 = scmp.ne.s32.totalorder %s34, %s50
    %p52 = scmp.eq.s32.totalorder %s26, 0
    %p53 = por %p51, %p52
    %s55 = sadd.s32 %s54, 1
    %p58 = scmp.eq.s32.totalorder %s20, 1
    %p59 = scmp.ne.s32.totalorder %s54, %s56
    %p60 = scmp.eq.s32.totalorder %s20, 0
    %p61 = por %p59, %p60
    %p62 = scmp.ne.s32.totalorder %s54, %s56
    %p63 = scmp.eq.s32.totalorder %s25, 1
    %p64 = por %p62, %p63
    %p65 = scmp.ne.s32.totalorder %s56, %s57
    %p66 = scmp.eq.s32.totalorder %s25, 0
    %p67 = por %p65, %p66
    %p68 = scmp.ne.s32.totalorder %s56, %s57
    %p69 = scmp.eq.s32.totalorder %s26, 1
    %p70 = por %p68, %p69
    %p72 = scmp.ne.s32.totalorder %s57, %s71
    %p73 = scmp.eq.s32.totalorder %s26, 0
    %p74 = por %p72, %p73
    %s76 = sadd.s32 %s75, 1
    %p79 = scmp.eq.s32.totalorder %s20, 1
    %p80 = scmp.ne.s32.totalorder %s75, %s77
    %p81 = scmp.eq.s32.totalorder %s20, 0
    %p82 = por %p80, %p81
    %p83 = scmp.ne.s32.totalorder %s75, %s77
    %p84 = scmp.eq.s32.totalorder %s25, 1
    %p85 = por %p83, %p84
    %p86 = scmp.ne.s32.totalorder %s77, %s78
    %p87 = scmp.eq.s32.totalorder %s25, 0
    %p88 = por %p86, %p87
    %p89 = scmp.ne.s32.totalorder %s77, %s78
    %p90 = scmp.eq.s32.totalorder %s26, 1
    %p91 = por %p89, %p90
    %p93 = scmp.ne.s32.totalorder %s78, %s92
    %p94 = scmp.eq.s32.totalorder %s26, 0
    %p95 = por %p93, %p94
    %s97 = sadd.s32 %s96, 1
    %p100 = scmp.eq.s32.totalorder %s20, 1
    %p101 = scmp.ne.s32.totalorder %s96, %s98
    %p102 = scmp.eq.s32.totalorder %s20, 0
    %p103 = por %p101, %p102
    %p104 = scmp.ne.s32.totalorder %s96, %s98
    %p105 = scmp.eq.s32.totalorder %s25, 1
    %p106 = por %p104, %p105
    %p107 = scmp.ne.s32.totalorder %s98, %s99
    %p108 = scmp.eq.s32.totalorder %s25, 0
    %p109 = por %p107, %p108
    %p110 = scmp.ne.s32.totalorder %s98, %s99
    %p111 = scmp.eq.s32.totalorder %s26, 1
    %p112 = por %p110, %p111
    %p114 = scmp.ne.s32.totalorder %s99, %s113
    %p115 = scmp.eq.s32.totalorder %s26, 0
    %p116 = por %p114, %p115
    %s118 = sadd.s32 %s117, 1
    %p121 = scmp.eq.s32.totalorder %s20, 1
    %p122 = scmp.ne.s32.totalorder %s117, %s119
    %p123 = scmp.eq.s32.totalorder %s20, 0
    %p124 = por %p122, %p123
    %p125 = scmp.ne.s32.totalorder %s117, %s119
    %p126 = scmp.eq.s32.totalorder %s25, 1
    %p127 = por %p125, %p126
    %p128 = scmp.ne.s32.totalorder %s119, %s120
    %p129 = scmp.eq.s32.totalorder %s25, 0
    %p130 = por %p128, %p129
    %p131 = scmp.ne.s32.totalorder %s119, %s120
    %p132 = scmp.eq.s32.totalorder %s26, 1
    %p133 = por %p131, %p132
    %p135 = scmp.ne.s32.totalorder %s120, %s134
    %p136 = scmp.eq.s32.totalorder %s26, 0
    %p137 = por %p135, %p136
    %s139 = sadd.s32 %s138, 1
    %p142 = scmp.eq.s32.totalorder %s20, 1
    %p143 = scmp.ne.s32.totalorder %s138, %s140
    %p144 = scmp.eq.s32.totalorder %s20, 0
    %p145 = por %p143, %p144
    %p146 = scmp.ne.s32.totalorder %s138, %s140
    %p147 = scmp.eq.s32.totalorder %s25, 1
    %p148 = por %p146, %p147
    %p149 = scmp.ne.s32.totalorder %s140, %s141
    %p150 = scmp.eq.s32.totalorder %s25, 0
    %p151 = por %p149, %p150
    %p152 = scmp.ne.s32.totalorder %s140, %s141
    %p153 = scmp.eq.s32.totalorder %s26, 1
    %p154 = por %p152, %p153
    %p156 = scmp.ne.s32.totalorder %s141, %s155
    %p157 = scmp.eq.s32.totalorder %s26, 0
    %p158 = por %p156, %p157
    %s160 = sadd.s32 %s159, 1
    %p163 = scmp.eq.s32.totalorder %s20, 1
    %p164 = scmp.ne.s32.totalorder %s159, %s161
    %p165 = scmp.eq.s32.totalorder %s20, 0
    %p166 = por %p164, %p165
    %p167 = scmp.ne.s32.totalorder %s159, %s161
    %p168 = scmp.eq.s32.totalorder %s25, 1
    %p169 = por %p167, %p168
    %p170 = scmp.ne.s32.totalorder %s161, %s162
    %p171 = scmp.eq.s32.totalorder %s25, 0
    %p172 = por %p170, %p171
    %p173 = scmp.ne.s32.totalorder %s161, %s162
    %p174 = scmp.eq.s32.totalorder %s26, 1
    %p175 = por %p173, %p174
    %p177 = scmp.ne.s32.totalorder %s162, %s176
    %p178 = scmp.eq.s32.totalorder %s26, 0
    %p179 = por %p177, %p178
    %s181 = sadd.s32 %s180, 1
    %p184 = scmp.eq.s32.totalorder %s20, 1
    %p185 = scmp.ne.s32.totalorder %s180, %s182
    %p186 = scmp.eq.s32.totalorder %s20, 0
    %p187 = por %p185, %p186
    %p188 = scmp.ne.s32.totalorder %s180, %s182
    %p189 = scmp.eq.s32.totalorder %s25, 1
    %p190 = por %p188, %p189
    %p191 = scmp.ne.s32.totalorder %s182, %s183
    %p192 = scmp.eq.s32.totalorder %s25, 0
    %p193 = por %p191, %p192
    %p194 = scmp.ne.s32.totalorder %s182, %s183
    %p195 = scmp.eq.s32.totalorder %s26, 1
    %p196 = por %p194, %p195
    %p198 = scmp.ne.s32.totalorder %s183, %s197
    %p199 = scmp.eq.s32.totalorder %s26, 0
    %p200 = por %p198, %p199
    %s202 = sadd.s32 %s201, 1
    %p205 = scmp.eq.s32.totalorder %s20, 1
    %p206 = scmp.ne.s32.totalorder %s201, %s203
    %p207 = scmp.eq.s32.totalorder %s20, 0
    %p208 = por %p206, %p207
    %p209 = scmp.ne.s32.totalorder %s201, %s203
    %p210 = scmp.eq.s32.totalorder %s25, 1
    %p211 = por %p209, %p210
    %p212 = scmp.ne.s32.totalorder %s203, %s204
    %p213 = scmp.eq.s32.totalorder %s25, 0
    %p214 = por %p212, %p213
    %p215 = scmp.ne.s32.totalorder %s203, %s204
    %p216 = scmp.eq.s32.totalorder %s26, 1
    %p217 = por %p215, %p216
    %p219 = scmp.ne.s32.totalorder %s204, %s218
    %p220 = scmp.eq.s32.totalorder %s26, 0
    %p221 = por %p219, %p220
    %s223 = sadd.s32 %s222, 1
    %p226 = scmp.eq.s32.totalorder %s20, 1
    %p227 = scmp.ne.s32.totalorder %s222, %s224
    %p228 = scmp.eq.s32.totalorder %s20, 0
    %p229 = por %p227, %p228
    %p230 = scmp.ne.s32.totalorder %s222, %s224
    %p231 = scmp.eq.s32.totalorder %s25, 1
    %p232 = por %p230, %p231
    %p233 = scmp.ne.s32.totalorder %s224, %s225
    %p234 = scmp.eq.s32.totalorder %s25, 0
    %p235 = por %p233, %p234
    %p236 = scmp.ne.s32.totalorder %s224, %s225
    %p237 = scmp.eq.s32.totalorder %s26, 1
    %p238 = por %p236, %p237
    %p240 = scmp.ne.s32.totalorder %s225, %s239
    %p241 = scmp.eq.s32.totalorder %s26, 0
    %p242 = por %p240, %p241
    %s244 = sadd.s32 %s243, 1
    %p247 = scmp.eq.s32.totalorder %s20, 1
    %p248 = scmp.ne.s32.totalorder %s243, %s245
    %p249 = scmp.eq.s32.totalorder %s20, 0
    %p250 = por %p248, %p249
    %p251 = scmp.ne.s32.totalorder %s243, %s245
    %p252 = scmp.eq.s32.totalorder %s25, 1
    %p253 = por %p251, %p252
    %p254 = scmp.ne.s32.totalorder %s245, %s246
    %p255 = scmp.eq.s32.totalorder %s25, 0
    %p256 = por %p254, %p255
    %p257 = scmp.ne.s32.totalorder %s245, %s246
    %p258 = scmp.eq.s32.totalorder %s26, 1
    %p259 = por %p257, %p258
    %p261 = scmp.ne.s32.totalorder %s246, %s260
    %p262 = scmp.eq.s32.totalorder %s26, 0
    %p263 = por %p261, %p262
    %s265 = sadd.s32 %s264, 1
    %p268 = scmp.eq.s32.totalorder %s20, 1
    %p269 = scmp.ne.s32.totalorder %s264, %s266
    %p270 = scmp.eq.s32.totalorder %s20, 0
    %p271 = por %p269, %p270
    %p272 = scmp.ne.s32.totalorder %s264, %s266
    %p273 = scmp.eq.s32.totalorder %s25, 1
    %p274 = por %p272, %p273
    %p275 = scmp.ne.s32.totalorder %s266, %s267
    %p276 = scmp.eq.s32.totalorder %s25, 0
    %p277 = por %p275, %p276
    %p278 = scmp.ne.s32.totalorder %s266, %s267
    %p279 = scmp.eq.s32.totalorder %s26, 1
    %p280 = por %p278, %p279
    %p282 = scmp.ne.s32.totalorder %s267, %s281
    %p283 = scmp.eq.s32.totalorder %s26, 0
    %p284 = por %p282, %p283
    %s286 = sadd.s32 %s285, 1
    %p289 = scmp.eq.s32.totalorder %s20, 1
    %p290 = scmp.ne.s32.totalorder %s285, %s287
    %p291 = scmp.eq.s32.totalorder %s20, 0
    %p292 = por %p290, %p291
    %p293 = scmp.ne.s32.totalorder %s285, %s287
    %p294 = scmp.eq.s32.totalorder %s25, 1
    %p295 = por %p293, %p294
    %p296 = scmp.ne.s32.totalorder %s287, %s288
    %p297 = scmp.eq.s32.totalorder %s25, 0
    %p298 = por %p296, %p297
    %p299 = scmp.ne.s32.totalorder %s287, %s288
    %p300 = scmp.eq.s32.totalorder %s26, 1
    %p301 = por %p299, %p300
    %p303 = scmp.ne.s32.totalorder %s288, %s302
    %p304 = scmp.eq.s32.totalorder %s26, 0
    %p305 = por %p303, %p304
    %s307 = sadd.s32 %s306, 1
    %p310 = scmp.eq.s32.totalorder %s20, 1
    %p311 = scmp.ne.s32.totalorder %s306, %s308
    %p312 = scmp.eq.s32.totalorder %s20, 0
    %p313 = por %p311, %p312
    %p314 = scmp.ne.s32.totalorder %s306, %s308
    %p315 = scmp.eq.s32.totalorder %s25, 1
    %p316 = por %p314, %p315
    %p317 = scmp.ne.s32.totalorder %s308, %s309
    %p318 = scmp.eq.s32.totalorder %s25, 0
    %p319 = por %p317, %p318
    %p320 = scmp.ne.s32.totalorder %s308, %s309
    %p321 = scmp.eq.s32.totalorder %s26, 1
    %p322 = por %p320, %p321
    %p324 = scmp.ne.s32.totalorder %s309, %s323
    %p325 = scmp.eq.s32.totalorder %s26, 0
    %p326 = por %p324, %p325
    %s327 = ssub.s32 %s20, %s27
    %p328 = scmp.eq.s32.totalorder %s327, 0
    %s330 = sadd.s32 %s329, 1
    %s331 = scalar_select %p328, %s329, %s330
    %p334 = pneg %p328
    %p335 = scmp.eq.s32.totalorder %s20, 1
    %p336 = por %p334, %p335
    %p337 = scmp.ne.s32.totalorder %s329, %s332
    %p338 = scmp.eq.s32.totalorder %s20, 0
    %p339 = por %p337, %p338
    %p340 = scmp.ne.s32.totalorder %s329, %s332
    %p341 = scmp.eq.s32.totalorder %s25, 1
    %p342 = por %p340, %p341
    %p343 = scmp.ne.s32.totalorder %s332, %s333
    %p344 = scmp.eq.s32.totalorder %s25, 0
    %p345 = por %p343, %p344
    %p346 = scmp.ne.s32.totalorder %s332, %s333
    %p347 = scmp.eq.s32.totalorder %s26, 1
    %p348 = por %p346, %p347
    %p350 = scmp.ne.s32.totalorder %s333, %s349
    %p351 = scmp.eq.s32.totalorder %s26, 0
    %p352 = por %p350, %p351
    %p353 = scmp.le.s32.totalorder 1, %s20
    %p354 = scmp.lt.s32.totalorder %s20, 3
    %p355 = pnand %p353, %p354
    %p356 = pneg %p355
    // Predicated region
    $region9: #{tpu_custom_call.1} parent=5 // pred_check
      _
    $region10: #{tpu_custom_call.1} parent=5 // pred_check_branch
      %358 = sbr.rel (%p355) target = $region12
    $region11: #{tpu_custom_call.1} parent=5 // pred_region
      %s359 = ssub.s32 %s20, 1
      // Predicated region
      $region13: #{tpu_custom_call.1} parent=11 // pred_check
        %p360 = pneg %p67
      $region14: #{tpu_custom_call.1} parent=11 // pred_check_branch
        %362 = sbr.rel (%p360) target = $region16
      $region15: #{tpu_custom_call.1} parent=11 // pred_region
        _
      $region16: #{tpu_custom_call.1} parent=11 // pred_fallthru
        _
      // Predicated region
      $region17: #{tpu_custom_call.1} parent=11 // pred_check
        %p363 = pneg %p88
      $region18: #{tpu_custom_call.1} parent=11 // pred_check_branch
        %365 = sbr.rel (%p363) target = $region20
      $region19: #{tpu_custom_call.1} parent=11 // pred_region
        _
      $region20: #{tpu_custom_call.1} parent=11 // pred_fallthru
        _
      // Predicated region
      $region21: #{tpu_custom_call.1} parent=11 // pred_check
        %p366 = pneg %p109
      $region22: #{tpu_custom_call.1} parent=11 // pred_check_branch
        %368 = sbr.rel (%p366) target = $region24
      $region23: #{tpu_custom_call.1} parent=11 // pred_region
        _
      $region24: #{tpu_custom_call.1} parent=11 // pred_fallthru
        _
      // Predicated region
      $region25: #{tpu_custom_call.1} parent=11 // pred_check
        %p369 = pneg %p130
      $region26: #{tpu_custom_call.1} parent=11 // pred_check_branch
        %371 = sbr.rel (%p369) target = $region28
      $region27: #{tpu_custom_call.1} parent=11 // pred_region
        _
      $region28: #{tpu_custom_call.1} parent=11 // pred_fallthru
        _
      // Predicated region
      $region29: #{tpu_custom_call.1} parent=11 // pred_check
        %p372 = pneg %p151
      $region30: #{tpu_custom_call.1} parent=11 // pred_check_branch
        %374 = sbr.rel (%p372) target = $region32
      $region31: #{tpu_custom_call.1} parent=11 // pred_region
        _
      $region32: #{tpu_custom_call.1} parent=11 // pred_fallthru
        _
      // Predicated region
      $region33: #{tpu_custom_call.1} parent=11 // pred_check
        %p375 = pneg %p172
      $region34: #{tpu_custom_call.1} parent=11 // pred_check_branch
        %377 = sbr.rel (%p375) target = $region36
      $region35: #{tpu_custom_call.1} parent=11 // pred_region
        _
      $region36: #{tpu_custom_call.1} parent=11 // pred_fallthru
        _
      // Predicated region
      $region37: #{tpu_custom_call.1} parent=11 // pred_check
        %p378 = pneg %p193
      $region38: #{tpu_custom_call.1} parent=11 // pred_check_branch
        %380 = sbr.rel (%p378) target = $region40
      $region39: #{tpu_custom_call.1} parent=11 // pred_region
        _
      $region40: #{tpu_custom_call.1} parent=11 // pred_fallthru
        _
      // Predicated region
      $region41: #{tpu_custom_call.1} parent=11 // pred_check
        %p381 = pneg %p214
      $region42: #{tpu_custom_call.1} parent=11 // pred_check_branch
        %383 = sbr.rel (%p381) target = $region44
      $region43: #{tpu_custom_call.1} parent=11 // pred_region
        _
      $region44: #{tpu_custom_call.1} parent=11 // pred_fallthru
        _
      // Predicated region
      $region45: #{tpu_custom_call.1} parent=11 // pred_check
        %p384 = pneg %p235
      $region46: #{tpu_custom_call.1} parent=11 // pred_check_branch
        %386 = sbr.rel (%p384) target = $region48
      $region47: #{tpu_custom_call.1} parent=11 // pred_region
        _
      $region48: #{tpu_custom_call.1} parent=11 // pred_fallthru
        _
      // Predicated region
      $region49: #{tpu_custom_call.1} parent=11 // pred_check
        %p387 = pneg %p256
      $region50: #{tpu_custom_call.1} parent=11 // pred_check_branch
        %389 = sbr.rel (%p387) target = $region52
      $region51: #{tpu_custom_call.1} parent=11 // pred_region
        _
      $region52: #{tpu_custom_call.1} parent=11 // pred_fallthru
        _
      // Predicated region
      $region53: #{tpu_custom_call.1} parent=11 // pred_check
        %p390 = pneg %p277
      $region54: #{tpu_custom_call.1} parent=11 // pred_check_branch
        %392 = sbr.rel (%p390) target = $region56
      $region55: #{tpu_custom_call.1} parent=11 // pred_region
        _
      $region56: #{tpu_custom_call.1} parent=11 // pred_fallthru
        _
      // Predicated region
      $region57: #{tpu_custom_call.1} parent=11 // pred_check
        %p393 = pneg %p298
      $region58: #{tpu_custom_call.1} parent=11 // pred_check_branch
        %395 = sbr.rel (%p393) target = $region60
      $region59: #{tpu_custom_call.1} parent=11 // pred_region
        _
      $region60: #{tpu_custom_call.1} parent=11 // pred_fallthru
        _
      // Predicated region
      $region61: #{tpu_custom_call.1} parent=11 // pred_check
        %p396 = pneg %p319
      $region62: #{tpu_custom_call.1} parent=11 // pred_check_branch
        %398 = sbr.rel (%p396) target = $region64
      $region63: #{tpu_custom_call.1} parent=11 // pred_region
        _
      $region64: #{tpu_custom_call.1} parent=11 // pred_fallthru
        _
    $region12: #{tpu_custom_call.1} parent=5 // pred_fallthru
      _
    %p399 = scmp.lt.s32.totalorder %s20, 2
    // Predicated region
    $region65: #{tpu_custom_call.1} parent=5 // pred_check
      %p400 = pneg %p399
    $region66: #{tpu_custom_call.1} parent=5 // pred_check_branch
      %402 = sbr.rel (%p400) target = $region68
    $region67: #{tpu_custom_call.1} parent=5 // pred_region
      // Predicated region
      $region69: #{tpu_custom_call.1} parent=67 // pred_check
        %p403 = pneg %p40
      $region70: #{tpu_custom_call.1} parent=67 // pred_check_branch
        %405 = sbr.rel (%p403) target = $region72
      $region71: #{tpu_custom_call.1} parent=67 // pred_region
        %s406 = smul.u32 8, %s20
        %p407 = scmp.lt.s32.totalorder %s406, 15
        %s408 = scalar_select %p407, %s406, 15
        %s409 = smul.addr %s408, 8
        %s410 = scalar_lea.vmem %s0, %s409
        %s411 = smul.u32 8, %s20
      $region72: #{tpu_custom_call.1} parent=67 // pred_fallthru
        _
    $region68: #{tpu_custom_call.1} parent=5 // pred_fallthru
      _
    %p412 = scmp.le.s32.totalorder 1, %s20
    %p413 = scmp.lt.s32.totalorder %s20, 3
    %p414 = pnand %p412, %p413
    %p415 = pneg %p414
    // Predicated region
    $region73: #{tpu_custom_call.1} parent=5 // pred_check
      _
    $region74: #{tpu_custom_call.1} parent=5 // pred_check_branch
      %417 = sbr.rel (%p414) target = $region76
    $region75: #{tpu_custom_call.1} parent=5 // pred_region
      %s418 = ssub.s32 %s20, 1
      %s419 = smul.u32 8, %s25
      %p420 = scmp.lt.s32.totalorder %s419, 15
      %s421 = scalar_select %p420, %s419, 15
      %s422 = smul.addr %s421, 8
      %s423 = scalar_lea.vmem %s0, %s422
      %p424 = pneg %p46
      %p425 = pneg %p43
      %p426 = pneg %p67
      %p427 = pneg %p64
      %p428 = pneg %p88
      %p429 = pneg %p85
      %p430 = pneg %p109
      %p431 = pneg %p106
      %p432 = pneg %p130
      %p433 = pneg %p127
      %p434 = pneg %p151
      %p435 = pneg %p148
      %p436 = pneg %p172
      %p437 = pneg %p169
      %p438 = pneg %p193
      %p439 = pneg %p190
      %p440 = pneg %p214
      %p441 = pneg %p211
      %p442 = pneg %p235
      %p443 = pneg %p232
      %p444 = pneg %p256
      %p445 = pneg %p253
      %p446 = pneg %p277
      %p447 = pneg %p274
      %p448 = pneg %p298
      %p449 = pneg %p295
      %p450 = pneg %p319
      %p451 = pneg %p316
      %p452 = pneg %p345
      %p453 = pneg %p342
      %s454 = smul.u32 8, %s25
      %p455 = scmp.lt.s32.totalorder %s454, 15
      %s456 = scalar_select %p455, %s454, 15
      %s457 = smul.addr %s456, 8
      %s458 = scalar_lea.vmem %s14, %s457
      %s459 = smul.u32 8, %s25
      %p460 = scmp.lt.s32.totalorder %s459, 15
      %s461 = scalar_select %p460, %s459, 15
      %s462 = smul.addr %s461, 8
      %s463 = scalar_lea.vmem %s0, %s462
      %s464 = smul.u32 8, %s25
      %s465 = smul.u32 8, %s25
      %p466 = scmp.lt.s32.totalorder %s465, 15
      %s467 = scalar_select %p466, %s465, 15
      %s468 = smul.addr %s467, 8
      %s469 = scalar_lea.vmem %s14, %s468
      %s470 = smul.u32 8, %s25
      %v471 = vld [vmem:[%s463] sm:$0xff]
      %v472 = vld [vmem:[%s463 + $0x8] sm:$0xff]
      %v473 = vld [vmem:[%s463 + $0x10] sm:$0xff]
      %v474 = vld [vmem:[%s463 + $0x18] sm:$0xff]
      %v475 = vld [vmem:[%s463 + $0x20] sm:$0xff]
      %v476 = vld [vmem:[%s463 + $0x28] sm:$0xff]
      %v477 = vld [vmem:[%s463 + $0x30] sm:$0xff]
      %v478 = vld [vmem:[%s463 + $0x38] sm:$0xff]
      %v479 = vld [vmem:[%s1] sm:$0xf]
      %v480 = vld [vmem:[%s2] sm:$0x1]
      %v482 = vlaneseq
      %v483 = vshrl.u32 %v482, 7
      %v484 = vsub.s32 0, %v483
      %v485 = vrot.slane %v480, %v484
      %vm487 = vcmask 31744
      %v489 = vsel %vm487, %v471, 0
      %v492 = vsel %vm487, %v472, 0
      %v495 = vsel %vm487, %v473, 0
      %v498 = vsel %vm487, %v474, 0
      %v501 = vsel %vm487, %v475, 0
      %v504 = vsel %vm487, %v476, 0
      %v507 = vsel %vm487, %v477, 0
      %v510 = vsel %vm487, %v478, 0
      %vm512 = vcmask 1043456
      %v514 = vsel %vm512, %v479, 0
      %516 = vmatprep.subr.mxu0 0.0
      %517 = vmatpush1.msra.mxu0 %v514
      %518 = vmatprep.subr.mxu0 0.0
      %519 = vmatpush1.msra.mxu0 0.0
      %520 = vmatprep.subr.mxu0 0.0
      %521 = vmatpush1.msra.mxu0 0.0
      %522 = vmatprep.subr.mxu0 0.0
      %523 = vmatpush1.msra.mxu0 0.0
      %524 = vmatprep.subr.mxu0 0.0
      %525 = vmatpush1.msra.mxu0 0.0
      %526 = vmatprep.subr.mxu0 0.0
      %527 = vmatpush1.msra.mxu0 0.0
      %528 = vmatprep.subr.mxu0 0.0
      %529 = vmatpush1.msra.mxu0 0.0
      %530 = vmatprep.subr.mxu0 0.0
      %531 = vmatpush1.msra.mxu0 0.0
      %532 = vmatprep.subr.mxu0 0.0
      %533 = vmatpush1.msra.mxu0 0.0
      %534 = vmatprep.subr.mxu0 0.0
      %535 = vmatpush1.msra.mxu0 0.0
      %536 = vmatprep.subr.mxu0 0.0
      %537 = vmatpush1.msra.mxu0 0.0
      %538 = vmatprep.subr.mxu0 0.0
      %539 = vmatpush1.msra.mxu0 0.0
      %540 = vmatprep.subr.mxu0 0.0
      %541 = vmatpush1.msra.mxu0 0.0
      %542 = vmatprep.subr.mxu0 0.0
      %543 = vmatpush1.msra.mxu0 0.0
      %544 = vmatprep.subr.mxu0 0.0
      %545 = vmatpush1.msra.mxu0 0.0
      %546 = vmatprep.subr.mxu0 0.0
      %547 = vmatpush1.msra.mxu0 0.0
      %548 = vmatprep.subr.mxu0 0.0
      %549 = vmatpush1.msra.mxu0 0.0
      %550 = vmatprep.subr.mxu0 0.0
      %551 = vmatpush1.msra.mxu0 0.0
      %552 = vmatprep.subr.mxu0 0.0
      %553 = vmatpush1.msra.mxu0 0.0
      %554 = vmatprep.subr.mxu0 0.0
      %555 = vmatpush1.msra.mxu0 0.0
      %556 = vmatprep.subr.mxu0 0.0
      %557 = vmatpush1.msra.mxu0 0.0
      %558 = vmatprep.subr.mxu0 0.0
      %559 = vmatpush1.msra.mxu0 0.0
      %560 = vmatprep.subr.mxu0 0.0
      %561 = vmatpush1.msra.mxu0 0.0
      %562 = vmatprep.subr.mxu0 0.0
      %563 = vmatpush1.msra.mxu0 0.0
      %564 = vmatprep.subr.mxu0 0.0
      %565 = vmatpush1.msra.mxu0 0.0
      %566 = vmatprep.subr.mxu0 0.0
      %567 = vmatpush1.msra.mxu0 0.0
      %568 = vmatprep.subr.mxu0 0.0
      %569 = vmatpush1.msra.mxu0 0.0
      %570 = vmatprep.subr.mxu0 0.0
      %571 = vmatpush1.msra.mxu0 0.0
      %572 = vmatprep.subr.mxu0 0.0
      %573 = vmatpush1.msra.mxu0 0.0
      %574 = vmatprep.subr.mxu0 0.0
      %575 = vmatpush1.msra.mxu0 0.0
      %576 = vmatprep.subr.mxu0 0.0
      %577 = vmatpush1.msra.mxu0 0.0
      %578 = vmatprep.subr.mxu0 0.0
      %579 = vmatpush1.msra.mxu0 0.0
      %580 = vmatprep.mubr.f32.mxu0 0.0
      %581 = vmatmul.mubr.f32.gmra.mrb[0].mxu0 %v489
      %v582 = vpop.f32.mrb[0].mxu0
      %v583 = vadd.f32 %v485, %v582
      %v584 = vpop.f32.mrb[0].mxu0
      %585 = vmatprep.mubr.f32.mxu0 0.0
      %586 = vmatmul.mubr.f32.gmra.mrb[0].mxu0 %v492
      %v587 = vpop.f32.mrb[0].mxu0
      %v588 = vadd.f32 %v485, %v587
      %v589 = vpop.f32.mrb[0].mxu0
      %590 = vmatprep.mubr.f32.mxu0 0.0
      %591 = vmatmul.mubr.f32.gmra.mrb[0].mxu0 %v495
      %v592 = vpop.f32.mrb[0].mxu0
      %v593 = vadd.f32 %v485, %v592
      %v594 = vpop.f32.mrb[0].mxu0
      %595 = vmatprep.mubr.f32.mxu0 0.0
      %596 = vmatmul.mubr.f32.gmra.mrb[0].mxu0 %v498
      %v597 = vpop.f32.mrb[0].mxu0
      %v598 = vadd.f32 %v485, %v597
      %v599 = vpop.f32.mrb[0].mxu0
      %600 = vmatprep.mubr.f32.mxu0 0.0
      %601 = vmatmul.mubr.f32.gmra.mrb[0].mxu0 %v501
      %v602 = vpop.f32.mrb[0].mxu0
      %v603 = vadd.f32 %v485, %v602
      %v604 = vpop.f32.mrb[0].mxu0
      %605 = vmatprep.mubr.f32.mxu0 0.0
      %606 = vmatmul.mubr.f32.gmra.mrb[0].mxu0 %v504
      %v607 = vpop.f32.mrb[0].mxu0
      %v608 = vadd.f32 %v485, %v607
      %v609 = vpop.f32.mrb[0].mxu0
      %610 = vmatprep.mubr.f32.mxu0 0.0
      %611 = vmatmul.mubr.f32.gmra.mrb[0].mxu0 %v507
      %v612 = vpop.f32.mrb[0].mxu0
      %v613 = vadd.f32 %v485, %v612
      %v614 = vpop.f32.mrb[0].mxu0
      %615 = vmatprep.mubr.f32.mxu0 0.0
      %616 = vmatmul.mubr.f32.gmra.mrb[0].mxu0 %v510
      %v617 = vpop.f32.mrb[0].mxu0
      %v618 = vadd.f32 %v485, %v617
      %v619 = vpop.f32.mrb[0].mxu0
      %620 = vdwg.mxu0
      %v621 = vmax.f32 %v583, 0.0
      %v622 = vmax.f32 %v588, 0.0
      %v623 = vmax.f32 %v593, 0.0
      %v624 = vmax.f32 %v598, 0.0
      %v625 = vmax.f32 %v603, 0.0
      %v626 = vmax.f32 %v608, 0.0
      %v627 = vmax.f32 %v613, 0.0
      %v628 = vmax.f32 %v618, 0.0
      %v629 = vld [vmem:[%s3] sm:$0xff]
      %v630 = vld [vmem:[%s3 + $0x8] sm:$0xff]
      %v631 = vld [vmem:[%s3 + $0x10] sm:$0xff]
      %v632 = vld [vmem:[%s3 + $0x18] sm:$0xff]
      %v633 = vld [vmem:[%s4] sm:$0x1]
      %v635 = vlaneseq
      %v636 = vshrl.u32 %v635, 7
      %v637 = vsub.s32 0, %v636
      %v638 = vrot.slane %v633, %v637
      %vm640 = vcmask 261120
      %v642 = vsel %vm640, %v621, 0
      %v645 = vsel %vm640, %v622, 0
      %v648 = vsel %vm640, %v623, 0
      %v651 = vsel %vm640, %v624, 0
      %v654 = vsel %vm640, %v625, 0
      %v657 = vsel %vm640, %v626, 0
      %v660 = vsel %vm640, %v627, 0
      %v663 = vsel %vm640, %v628, 0
      %665 = vmatprep.subr.mxu0 0.0
      %666 = vmatpush1.msra.mxu0 %v629
      %667 = vmatprep.subr.mxu0 0.0
      %668 = vmatpush1.msra.mxu0 %v630
      %669 = vmatprep.subr.mxu0 0.0
      %670 = vmatpush1.msra.mxu0 %v631
      %671 = vmatprep.subr.mxu0 0.0
      %672 = vmatpush1.msra.mxu0 %v632
      %673 = vmatprep.subr.mxu0 0.0
      %674 = vmatpush1.msra.mxu0 0.0
      %675 = vmatprep.subr.mxu0 0.0
      %676 = vmatpush1.msra.mxu0 0.0
      %677 = vmatprep.subr.mxu0 0.0
      %678 = vmatpush1.msra.mxu0 0.0
      %679 = vmatprep.subr.mxu0 0.0
      %680 = vmatpush1.msra.mxu0 0.0
      %681 = vmatprep.subr.mxu0 0.0
      %682 = vmatpush1.msra.mxu0 0.0
      %683 = vmatprep.subr.mxu0 0.0
      %684 = vmatpush1.msra.mxu0 0.0
      %685 = vmatprep.subr.mxu0 0.0
      %686 = vmatpush1.msra.mxu0 0.0
      %687 = vmatprep.subr.mxu0 0.0
      %688 = vmatpush1.msra.mxu0 0.0
      %689 = vmatprep.subr.mxu0 0.0
      %690 = vmatpush1.msra.mxu0 0.0
      %691 = vmatprep.subr.mxu0 0.0
      %692 = vmatpush1.msra.mxu0 0.0
      %693 = vmatprep.subr.mxu0 0.0
      %694 = vmatpush1.msra.mxu0 0.0
      %695 = vmatprep.subr.mxu0 0.0
      %696 = vmatpush1.msra.mxu0 0.0
      %697 = vmatprep.subr.mxu0 0.0
      %698 = vmatpush1.msra.mxu0 0.0
      %699 = vmatprep.subr.mxu0 0.0
      %700 = vmatpush1.msra.mxu0 0.0
      %701 = vmatprep.subr.mxu0 0.0
      %702 = vmatpush1.msra.mxu0 0.0
      %703 = vmatprep.subr.mxu0 0.0
      %704 = vmatpush1.msra.mxu0 0.0
      %705 = vmatprep.subr.mxu0 0.0
      %706 = vmatpush1.msra.mxu0 0.0
      %707 = vmatprep.subr.mxu0 0.0
      %708 = vmatpush1.msra.mxu0 0.0
      %709 = vmatprep.subr.mxu0 0.0
      %710 = vmatpush1.msra.mxu0 0.0
      %711 = vmatprep.subr.mxu0 0.0
      %712 = vmatpush1.msra.mxu0 0.0
      %713 = vmatprep.subr.mxu0 0.0
      %714 = vmatpush1.msra.mxu0 0.0
      %715 = vmatprep.subr.mxu0 0.0
      %716 = vmatpush1.msra.mxu0 0.0
      %717 = vmatprep.subr.mxu0 0.0
      %718 = vmatpush1.msra.mxu0 0.0
      %719 = vmatprep.subr.mxu0 0.0
      %720 = vmatpush1.msra.mxu0 0.0
      %721 = vmatprep.subr.mxu0 0.0
      %722 = vmatpush1.msra.mxu0 0.0
      %723 = vmatprep.subr.mxu0 0.0
      %724 = vmatpush1.msra.mxu0 0.0
      %725 = vmatprep.subr.mxu0 0.0
      %726 = vmatpush1.msra.mxu0 0.0
      %727 = vmatprep.subr.mxu0 0.0
      %728 = vmatpush1.msra.mxu0 0.0
      %729 = vmatprep.mubr.f32.mxu0 0.0
      %730 = vmatmul.mubr.f32.gmra.mrb[0].mxu0 %v642
      %v731 = vpop.f32.mrb[0].mxu0
      %v732 = vadd.f32 %v638, %v731
      %v733 = vpop.f32.mrb[0].mxu0
      %734 = vmatprep.mubr.f32.mxu0 0.0
      %735 = vmatmul.mubr.f32.gmra.mrb[0].mxu0 %v645
      %v736 = vpop.f32.mrb[0].mxu0
      %v737 = vadd.f32 %v638, %v736
      %v738 = vpop.f32.mrb[0].mxu0
      %739 = vmatprep.mubr.f32.mxu0 0.0
      %740 = vmatmul.mubr.f32.gmra.mrb[0].mxu0 %v648
      %v741 = vpop.f32.mrb[0].mxu0
      %v742 = vadd.f32 %v638, %v741
      %v743 = vpop.f32.mrb[0].mxu0
      %744 = vmatprep.mubr.f32.mxu0 0.0
      %745 = vmatmul.mubr.f32.gmra.mrb[0].mxu0 %v651
      %v746 = vpop.f32.mrb[0].mxu0
      %v747 = vadd.f32 %v638, %v746
      %v748 = vpop.f32.mrb[0].mxu0
      %749 = vmatprep.mubr.f32.mxu0 0.0
      %750 = vmatmul.mubr.f32.gmra.mrb[0].mxu0 %v654
      %v751 = vpop.f32.mrb[0].mxu0
      %v752 = vadd.f32 %v638, %v751
      %v753 = vpop.f32.mrb[0].mxu0
      %754 = vmatprep.mubr.f32.mxu0 0.0
      %755 = vmatmul.mubr.f32.gmra.mrb[0].mxu0 %v657
      %v756 = vpop.f32.mrb[0].mxu0
      %v757 = vadd.f32 %v638, %v756
      %v758 = vpop.f32.mrb[0].mxu0
      %759 = vmatprep.mubr.f32.mxu0 0.0
      %760 = vmatmul.mubr.f32.gmra.mrb[0].mxu0 %v660
      %v761 = vpop.f32.mrb[0].mxu0
      %v762 = vadd.f32 %v638, %v761
      %v763 = vpop.f32.mrb[0].mxu0
      %764 = vmatprep.mubr.f32.mxu0 0.0
      %765 = vmatmul.mubr.f32.gmra.mrb[0].mxu0 %v663
      %v766 = vpop.f32.mrb[0].mxu0
      %v767 = vadd.f32 %v638, %v766
      %v768 = vpop.f32.mrb[0].mxu0
      %769 = vdwg.mxu0
      %v770 = vlaneseq
      %v771 = vshrl.u32 %v770, 7
      %v772 = vlaneseq
      %v773 = vand.u32 %v772, 127
      %vm774 = vcmp.ge.s32.totalorder %v771, %v773
      %v775 = vsel %vm774, 1, 0
      %v776 = vcvt.s32.f32 %v775
      %v777 = vcvt.s32.f32 %v771
      %v778 = vadd.f32 %v777, 1.0
      %v779 = vrcp.pop %v778
      %v780 = vmul.f32 1.0, %v779
      %vm781 = vcmask 64512
      %v783 = vsel %vm781, %v776, 0
      %785 = vmatprep.subr.mxu0 0.0
      %786 = vmatpush1.msra.mxu0 %v732
      %787 = vmatprep.subr.mxu0 0.0
      %788 = vmatpush1.msra.mxu0 0.0
      %789 = vmatprep.subr.mxu0 0.0
      %790 = vmatpush1.msra.mxu0 0.0
      %791 = vmatprep.subr.mxu0 0.0
      %792 = vmatpush1.msra.mxu0 0.0
      %793 = vmatprep.subr.mxu0 0.0
      %794 = vmatpush1.msra.mxu0 0.0
      %795 = vmatprep.subr.mxu0 0.0
      %796 = vmatpush1.msra.mxu0 0.0
      %797 = vmatprep.subr.mxu0 0.0
      %798 = vmatpush1.msra.mxu0 0.0
      %799 = vmatprep.subr.mxu0 0.0
      %800 = vmatpush1.msra.mxu0 0.0
      %801 = vmatprep.subr.mxu0 0.0
      %802 = vmatpush1.msra.mxu0 0.0
      %803 = vmatprep.subr.mxu0 0.0
      %804 = vmatpush1.msra.mxu0 0.0
      %805 = vmatprep.subr.mxu0 0.0
      %806 = vmatpush1.msra.mxu0 0.0
      %807 = vmatprep.subr.mxu0 0.0
      %808 = vmatpush1.msra.mxu0 0.0
      %809 = vmatprep.subr.mxu0 0.0
      %810 = vmatpush1.msra.mxu0 0.0
      %811 = vmatprep.subr.mxu0 0.0
      %812 = vmatpush1.msra.mxu0 0.0
      %813 = vmatprep.subr.mxu0 0.0
      %814 = vmatpush1.msra.mxu0 0.0
      %815 = vmatprep.subr.mxu0 0.0
      %816 = vmatpush1.msra.mxu0 0.0
      %817 = vmatprep.subr.mxu0 0.0
      %818 = vmatpush1.msra.mxu0 0.0
      %819 = vmatprep.subr.mxu0 0.0
      %820 = vmatpush1.msra.mxu0 0.0
      %821 = vmatprep.subr.mxu0 0.0
      %822 = vmatpush1.msra.mxu0 0.0
      %823 = vmatprep.subr.mxu0 0.0
      %824 = vmatpush1.msra.mxu0 0.0
      %825 = vmatprep.subr.mxu0 0.0
      %826 = vmatpush1.msra.mxu0 0.0
      %827 = vmatprep.subr.mxu0 0.0
      %828 = vmatpush1.msra.mxu0 0.0
      %829 = vmatprep.subr.mxu0 0.0
      %830 = vmatpush1.msra.mxu0 0.0
      %831 = vmatprep.subr.mxu0 0.0
      %832 = vmatpush1.msra.mxu0 0.0
      %833 = vmatprep.subr.mxu0 0.0
      %834 = vmatpush1.msra.mxu0 0.0
      %835 = vmatprep.subr.mxu0 0.0
      %836 = vmatpush1.msra.mxu0 0.0
      %837 = vmatprep.subr.mxu0 0.0
      %838 = vmatpush1.msra.mxu0 0.0
      %839 = vmatprep.subr.mxu0 0.0
      %840 = vmatpush1.msra.mxu0 0.0
      %841 = vmatprep.subr.mxu0 0.0
      %842 = vmatpush1.msra.mxu0 0.0
      %843 = vmatprep.subr.mxu0 0.0
      %844 = vmatpush1.msra.mxu0 0.0
      %845 = vmatprep.subr.mxu0 0.0
      %846 = vmatpush1.msra.mxu0 0.0
      %847 = vmatprep.subr.mxu0 0.0
      %848 = vmatpush1.msra.mxu0 0.0
      %849 = vmatprep.mubr.f32.mxu0 0.0
      %850 = vmatmul.mubr.f32.gmra.mrb[0].mxu0 %v783
      %v851 = vpop.f32.mrb[0].mxu0
      %v852 = vadd.f32 0.0, %v851
      %v853 = vpop.f32.mrb[0].mxu0
      %854 = vdwg.mxu0
      %855 = vmatprep.subr.mxu0 0.0
      %856 = vmatpush1.msra.mxu0 %v737
      %857 = vmatprep.subr.mxu0 0.0
      %858 = vmatpush1.msra.mxu0 0.0
      %859 = vmatprep.subr.mxu0 0.0
      %860 = vmatpush1.msra.mxu0 0.0
      %861 = vmatprep.subr.mxu0 0.0
      %862 = vmatpush1.msra.mxu0 0.0
      %863 = vmatprep.subr.mxu0 0.0
      %864 = vmatpush1.msra.mxu0 0.0
      %865 = vmatprep.subr.mxu0 0.0
      %866 = vmatpush1.msra.mxu0 0.0
      %867 = vmatprep.subr.mxu0 0.0
      %868 = vmatpush1.msra.mxu0 0.0
      %869 = vmatprep.subr.mxu0 0.0
      %870 = vmatpush1.msra.mxu0 0.0
      %871 = vmatprep.subr.mxu0 0.0
      %872 = vmatpush1.msra.mxu0 0.0
      %873 = vmatprep.subr.mxu0 0.0
      %874 = vmatpush1.msra.mxu0 0.0
      %875 = vmatprep.subr.mxu0 0.0
      %876 = vmatpush1.msra.mxu0 0.0
      %877 = vmatprep.subr.mxu0 0.0
      %878 = vmatpush1.msra.mxu0 0.0
      %879 = vmatprep.subr.mxu0 0.0
      %880 = vmatpush1.msra.mxu0 0.0
      %881 = vmatprep.subr.mxu0 0.0
      %882 = vmatpush1.msra.mxu0 0.0
      %883 = vmatprep.subr.mxu0 0.0
      %884 = vmatpush1.msra.mxu0 0.0
      %885 = vmatprep.subr.mxu0 0.0
      %886 = vmatpush1.msra.mxu0 0.0
      %887 = vmatprep.subr.mxu0 0.0
      %888 = vmatpush1.msra.mxu0 0.0
      %889 = vmatprep.subr.mxu0 0.0
      %890 = vmatpush1.msra.mxu0 0.0
      %891 = vmatprep.subr.mxu0 0.0
      %892 = vmatpush1.msra.mxu0 0.0
      %893 = vmatprep.subr.mxu0 0.0
      %894 = vmatpush1.msra.mxu0 0.0
      %895 = vmatprep.subr.mxu0 0.0
      %896 = vmatpush1.msra.mxu0 0.0
      %897 = vmatprep.subr.mxu0 0.0
      %898 = vmatpush1.msra.mxu0 0.0
      %899 = vmatprep.subr.mxu0 0.0
      %900 = vmatpush1.msra.mxu0 0.0
      %901 = vmatprep.subr.mxu0 0.0
      %902 = vmatpush1.msra.mxu0 0.0
      %903 = vmatprep.subr.mxu0 0.0
      %904 = vmatpush1.msra.mxu0 0.0
      %905 = vmatprep.subr.mxu0 0.0
      %906 = vmatpush1.msra.mxu0 0.0
      %907 = vmatprep.subr.mxu0 0.0
      %908 = vmatpush1.msra.mxu0 0.0
      %909 = vmatprep.subr.mxu0 0.0
      %910 = vmatpush1.msra.mxu0 0.0
      %911 = vmatprep.subr.mxu0 0.0
      %912 = vmatpush1.msra.mxu0 0.0
      %913 = vmatprep.subr.mxu0 0.0
      %914 = vmatpush1.msra.mxu0 0.0
      %915 = vmatprep.subr.mxu0 0.0
      %916 = vmatpush1.msra.mxu0 0.0
      %917 = vmatprep.subr.mxu0 0.0
      %918 = vmatpush1.msra.mxu0 0.0
      %919 = vmatprep.mubr.f32.mxu0 0.0
      %920 = vmatmul.mubr.f32.gmra.mrb[0].mxu0 %v783
      %v921 = vpop.f32.mrb[0].mxu0
      %v922 = vadd.f32 0.0, %v921
      %v923 = vpop.f32.mrb[0].mxu0
      %924 = vdwg.mxu0
      %925 = vmatprep.subr.mxu0 0.0
      %926 = vmatpush1.msra.mxu0 %v742
      %927 = vmatprep.subr.mxu0 0.0
      %928 = vmatpush1.msra.mxu0 0.0
      %929 = vmatprep.subr.mxu0 0.0
      %930 = vmatpush1.msra.mxu0 0.0
      %931 = vmatprep.subr.mxu0 0.0
      %932 = vmatpush1.msra.mxu0 0.0
      %933 = vmatprep.subr.mxu0 0.0
      %934 = vmatpush1.msra.mxu0 0.0
      %935 = vmatprep.subr.mxu0 0.0
      %936 = vmatpush1.msra.mxu0 0.0
      %937 = vmatprep.subr.mxu0 0.0
      %938 = vmatpush1.msra.mxu0 0.0
      %939 = vmatprep.subr.mxu0 0.0
      %940 = vmatpush1.msra.mxu0 0.0
      %941 = vmatprep.subr.mxu0 0.0
      %942 = vmatpush1.msra.mxu0 0.0
      %943 = vmatprep.subr.mxu0 0.0
      %944 = vmatpush1.msra.mxu0 0.0
      %945 = vmatprep.subr.mxu0 0.0
      %946 = vmatpush1.msra.mxu0 0.0
      %947 = vmatprep.subr.mxu0 0.0
      %948 = vmatpush1.msra.mxu0 0.0
      %949 = vmatprep.subr.mxu0 0.0
      %950 = vmatpush1.msra.mxu0 0.0
      %951 = vmatprep.subr.mxu0 0.0
      %952 = vmatpush1.msra.mxu0 0.0
      %953 = vmatprep.subr.mxu0 0.0
      %954 = vmatpush1.msra.mxu0 0.0
      %955 = vmatprep.subr.mxu0 0.0
      %956 = vmatpush1.msra.mxu0 0.0
      %957 = vmatprep.subr.mxu0 0.0
      %958 = vmatpush1.msra.mxu0 0.0
      %959 = vmatprep.subr.mxu0 0.0
      %960 = vmatpush1.msra.mxu0 0.0
      %961 = vmatprep.subr.mxu0 0.0
      %962 = vmatpush1.msra.mxu0 0.0
      %963 = vmatprep.subr.mxu0 0.0
      %964 = vmatpush1.msra.mxu0 0.0
      %965 = vmatprep.subr.mxu0 0.0
      %966 = vmatpush1.msra.mxu0 0.0
      %967 = vmatprep.subr.mxu0 0.0
      %968 = vmatpush1.msra.mxu0 0.0
      %969 = vmatprep.subr.mxu0 0.0
      %970 = vmatpush1.msra.mxu0 0.0
      %971 = vmatprep.subr.mxu0 0.0
      %972 = vmatpush1.msra.mxu0 0.0
      %973 = vmatprep.subr.mxu0 0.0
      %974 = vmatpush1.msra.mxu0 0.0
      %975 = vmatprep.subr.mxu0 0.0
      %976 = vmatpush1.msra.mxu0 0.0
      %977 = vmatprep.subr.mxu0 0.0
      %978 = vmatpush1.msra.mxu0 0.0
      %979 = vmatprep.subr.mxu0 0.0
      %980 = vmatpush1.msra.mxu0 0.0
      %981 = vmatprep.subr.mxu0 0.0
      %982 = vmatpush1.msra.mxu0 0.0
      %983 = vmatprep.subr.mxu0 0.0
      %984 = vmatpush1.msra.mxu0 0.0
      %985 = vmatprep.subr.mxu0 0.0
      %986 = vmatpush1.msra.mxu0 0.0
      %987 = vmatprep.subr.mxu0 0.0
      %988 = vmatpush1.msra.mxu0 0.0
      %989 = vmatprep.mubr.f32.mxu0 0.0
      %990 = vmatmul.mubr.f32.gmra.mrb[0].mxu0 %v783
      %v991 = vpop.f32.mrb[0].mxu0
      %v992 = vadd.f32 0.0, %v991
      %v993 = vpop.f32.mrb[0].mxu0
      %994 = vdwg.mxu0
      %995 = vmatprep.subr.mxu0 0.0
      %996 = vmatpush1.msra.mxu0 %v747
      %997 = vmatprep.subr.mxu0 0.0
      %998 = vmatpush1.msra.mxu0 0.0
      %999 = vmatprep.subr.mxu0 0.0
      %1000 = vmatpush1.msra.mxu0 0.0
      %1001 = vmatprep.subr.mxu0 0.0
      %1002 = vmatpush1.msra.mxu0 0.0
      %1003 = vmatprep.subr.mxu0 0.0
      %1004 = vmatpush1.msra.mxu0 0.0
      %1005 = vmatprep.subr.mxu0 0.0
      %1006 = vmatpush1.msra.mxu0 0.0
      %1007 = vmatprep.subr.mxu0 0.0
      %1008 = vmatpush1.msra.mxu0 0.0
      %1009 = vmatprep.subr.mxu0 0.0
      %1010 = vmatpush1.msra.mxu0 0.0
      %1011 = vmatprep.subr.mxu0 0.0
      %1012 = vmatpush1.msra.mxu0 0.0
      %1013 = vmatprep.subr.mxu0 0.0
      %1014 = vmatpush1.msra.mxu0 0.0
      %1015 = vmatprep.subr.mxu0 0.0
      %1016 = vmatpush1.msra.mxu0 0.0
      %1017 = vmatprep.subr.mxu0 0.0
      %1018 = vmatpush1.msra.mxu0 0.0
      %1019 = vmatprep.subr.mxu0 0.0
      %1020 = vmatpush1.msra.mxu0 0.0
      %1021 = vmatprep.subr.mxu0 0.0
      %1022 = vmatpush1.msra.mxu0 0.0
      %1023 = vmatprep.subr.mxu0 0.0
      %1024 = vmatpush1.msra.mxu0 0.0
      %1025 = vmatprep.subr.mxu0 0.0
      %1026 = vmatpush1.msra.mxu0 0.0
      %1027 = vmatprep.subr.mxu0 0.0
      %1028 = vmatpush1.msra.mxu0 0.0
      %1029 = vmatprep.subr.mxu0 0.0
      %1030 = vmatpush1.msra.mxu0 0.0
      %1031 = vmatprep.subr.mxu0 0.0
      %1032 = vmatpush1.msra.mxu0 0.0
      %1033 = vmatprep.subr.mxu0 0.0
      %1034 = vmatpush1.msra.mxu0 0.0
      %1035 = vmatprep.subr.mxu0 0.0
      %1036 = vmatpush1.msra.mxu0 0.0
      %1037 = vmatprep.subr.mxu0 0.0
      %1038 = vmatpush1.msra.mxu0 0.0
      %1039 = vmatprep.subr.mxu0 0.0
      %1040 = vmatpush1.msra.mxu0 0.0
      %1041 = vmatprep.subr.mxu0 0.0
      %1042 = vmatpush1.msra.mxu0 0.0
      %1043 = vmatprep.subr.mxu0 0.0
      %1044 = vmatpush1.msra.mxu0 0.0
      %1045 = vmatprep.subr.mxu0 0.0
      %1046 = vmatpush1.msra.mxu0 0.0
      %1047 = vmatprep.subr.mxu0 0.0
      %1048 = vmatpush1.msra.mxu0 0.0
      %1049 = vmatprep.subr.mxu0 0.0
      %1050 = vmatpush1.msra.mxu0 0.0
      %1051 = vmatprep.subr.mxu0 0.0
      %1052 = vmatpush1.msra.mxu0 0.0
      %1053 = vmatprep.subr.mxu0 0.0
      %1054 = vmatpush1.msra.mxu0 0.0
      %1055 = vmatprep.subr.mxu0 0.0
      %1056 = vmatpush1.msra.mxu0 0.0
      %1057 = vmatprep.subr.mxu0 0.0
      %1058 = vmatpush1.msra.mxu0 0.0
      %1059 = vmatprep.mubr.f32.mxu0 0.0
      %1060 = vmatmul.mubr.f32.gmra.mrb[0].mxu0 %v783
      %v1061 = vpop.f32.mrb[0].mxu0
      %v1062 = vadd.f32 0.0, %v1061
      %v1063 = vpop.f32.mrb[0].mxu0
      %1064 = vdwg.mxu0
      %1065 = vmatprep.subr.mxu0 0.0
      %1066 = vmatpush1.msra.mxu0 %v752
      %1067 = vmatprep.subr.mxu0 0.0
      %1068 = vmatpush1.msra.mxu0 0.0
      %1069 = vmatprep.subr.mxu0 0.0
      %1070 = vmatpush1.msra.mxu0 0.0
      %1071 = vmatprep.subr.mxu0 0.0
      %1072 = vmatpush1.msra.mxu0 0.0
      %1073 = vmatprep.subr.mxu0 0.0
      %1074 = vmatpush1.msra.mxu0 0.0
      %1075 = vmatprep.subr.mxu0 0.0
      %1076 = vmatpush1.msra.mxu0 0.0
      %1077 = vmatprep.subr.mxu0 0.0
      %1078 = vmatpush1.msra.mxu0 0.0
      %1079 = vmatprep.subr.mxu0 0.0
      %1080 = vmatpush1.msra.mxu0 0.0
      %1081 = vmatprep.subr.mxu0 0.0
      %1082 = vmatpush1.msra.mxu0 0.0
      %1083 = vmatprep.subr.mxu0 0.0
      %1084 = vmatpush1.msra.mxu0 0.0
      %1085 = vmatprep.subr.mxu0 0.0
      %1086 = vmatpush1.msra.mxu0 0.0
      %1087 = vmatprep.subr.mxu0 0.0
      %1088 = vmatpush1.msra.mxu0 0.0
      %1089 = vmatprep.subr.mxu0 0.0
      %1090 = vmatpush1.msra.mxu0 0.0
      %1091 = vmatprep.subr.mxu0 0.0
      %1092 = vmatpush1.msra.mxu0 0.0
      %1093 = vmatprep.subr.mxu0 0.0
      %1094 = vmatpush1.msra.mxu0 0.0
      %1095 = vmatprep.subr.mxu0 0.0
      %1096 = vmatpush1.msra.mxu0 0.0
      %1097 = vmatprep.subr.mxu0 0.0
      %1098 = vmatpush1.msra.mxu0 0.0
      %1099 = vmatprep.subr.mxu0 0.0
      %1100 = vmatpush1.msra.mxu0 0.0
      %1101 = vmatprep.subr.mxu0 0.0
      %1102 = vmatpush1.msra.mxu0 0.0
      %1103 = vmatprep.subr.mxu0 0.0
      %1104 = vmatpush1.msra.mxu0 0.0
      %1105 = vmatprep.subr.mxu0 0.0
      %1106 = vmatpush1.msra.mxu0 0.0
      %1107 = vmatprep.subr.mxu0 0.0
      %1108 = vmatpush1.msra.mxu0 0.0
      %1109 = vmatprep.subr.mxu0 0.0
      %1110 = vmatpush1.msra.mxu0 0.0
      %1111 = vmatprep.subr.mxu0 0.0
      %1112 = vmatpush1.msra.mxu0 0.0
      %1113 = vmatprep.subr.mxu0 0.0
      %1114 = vmatpush1.msra.mxu0 0.0
      %1115 = vmatprep.subr.mxu0 0.0
      %1116 = vmatpush1.msra.mxu0 0.0
      %1117 = vmatprep.subr.mxu0 0.0
      %1118 = vmatpush1.msra.mxu0 0.0
      %1119 = vmatprep.subr.mxu0 0.0
      %1120 = vmatpush1.msra.mxu0 0.0
      %1121 = vmatprep.subr.mxu0 0.0
      %1122 = vmatpush1.msra.mxu0 0.0
      %1123 = vmatprep.subr.mxu0 0.0
      %1124 = vmatpush1.msra.mxu0 0.0
      %1125 = vmatprep.subr.mxu0 0.0
      %1126 = vmatpush1.msra.mxu0 0.0
      %1127 = vmatprep.subr.mxu0 0.0
      %1128 = vmatpush1.msra.mxu0 0.0
      %1129 = vmatprep.mubr.f32.mxu0 0.0
      %1130 = vmatmul.mubr.f32.gmra.mrb[0].mxu0 %v783
      %v1131 = vpop.f32.mrb[0].mxu0
      %v1132 = vadd.f32 0.0, %v1131
      %v1133 = vpop.f32.mrb[0].mxu0
      %1134 = vdwg.mxu0
      %1135 = vmatprep.subr.mxu0 0.0
      %1136 = vmatpush1.msra.mxu0 %v757
      %1137 = vmatprep.subr.mxu0 0.0
      %1138 = vmatpush1.msra.mxu0 0.0
      %1139 = vmatprep.subr.mxu0 0.0
      %1140 = vmatpush1.msra.mxu0 0.0
      %1141 = vmatprep.subr.mxu0 0.0
      %1142 = vmatpush1.msra.mxu0 0.0
      %1143 = vmatprep.subr.mxu0 0.0
      %1144 = vmatpush1.msra.mxu0 0.0
      %1145 = vmatprep.subr.mxu0 0.0
      %1146 = vmatpush1.msra.mxu0 0.0
      %1147 = vmatprep.subr.mxu0 0.0
      %1148 = vmatpush1.msra.mxu0 0.0
      %1149 = vmatprep.subr.mxu0 0.0
      %1150 = vmatpush1.msra.mxu0 0.0
      %1151 = vmatprep.subr.mxu0 0.0
      %1152 = vmatpush1.msra.mxu0 0.0
      %1153 = vmatprep.subr.mxu0 0.0
      %1154 = vmatpush1.msra.mxu0 0.0
      %1155 = vmatprep.subr.mxu0 0.0
      %1156 = vmatpush1.msra.mxu0 0.0
      %1157 = vmatprep.subr.mxu0 0.0
      %1158 = vmatpush1.msra.mxu0 0.0
      %1159 = vmatprep.subr.mxu0 0.0
      %1160 = vmatpush1.msra.mxu0 0.0
      %1161 = vmatprep.subr.mxu0 0.0
      %1162 = vmatpush1.msra.mxu0 0.0
      %1163 = vmatprep.subr.mxu0 0.0
      %1164 = vmatpush1.msra.mxu0 0.0
      %1165 = vmatprep.subr.mxu0 0.0
      %1166 = vmatpush1.msra.mxu0 0.0
      %1167 = vmatprep.subr.mxu0 0.0
      %1168 = vmatpush1.msra.mxu0 0.0
      %1169 = vmatprep.subr.mxu0 0.0
      %1170 = vmatpush1.msra.mxu0 0.0
      %1171 = vmatprep.subr.mxu0 0.0
      %1172 = vmatpush1.msra.mxu0 0.0
      %1173 = vmatprep.subr.mxu0 0.0
      %1174 = vmatpush1.msra.mxu0 0.0
      %1175 = vmatprep.subr.mxu0 0.0
      %1176 = vmatpush1.msra.mxu0 0.0
      %1177 = vmatprep.subr.mxu0 0.0
      %1178 = vmatpush1.msra.mxu0 0.0
      %1179 = vmatprep.subr.mxu0 0.0
      %1180 = vmatpush1.msra.mxu0 0.0
      %1181 = vmatprep.subr.mxu0 0.0
      %1182 = vmatpush1.msra.mxu0 0.0
      %1183 = vmatprep.subr.mxu0 0.0
      %1184 = vmatpush1.msra.mxu0 0.0
      %1185 = vmatprep.subr.mxu0 0.0
      %1186 = vmatpush1.msra.mxu0 0.0
      %1187 = vmatprep.subr.mxu0 0.0
      %1188 = vmatpush1.msra.mxu0 0.0
      %1189 = vmatprep.subr.mxu0 0.0
      %1190 = vmatpush1.msra.mxu0 0.0
      %1191 = vmatprep.subr.mxu0 0.0
      %1192 = vmatpush1.msra.mxu0 0.0
      %1193 = vmatprep.subr.mxu0 0.0
      %1194 = vmatpush1.msra.mxu0 0.0
      %1195 = vmatprep.subr.mxu0 0.0
      %1196 = vmatpush1.msra.mxu0 0.0
      %1197 = vmatprep.subr.mxu0 0.0
      %1198 = vmatpush1.msra.mxu0 0.0
      %1199 = vmatprep.mubr.f32.mxu0 0.0
      %1200 = vmatmul.mubr.f32.gmra.mrb[0].mxu0 %v783
      %v1201 = vpop.f32.mrb[0].mxu0
      %v1202 = vadd.f32 0.0, %v1201
      %v1203 = vpop.f32.mrb[0].mxu0
      %1204 = vdwg.mxu0
      %1205 = vmatprep.subr.mxu0 0.0
      %1206 = vmatpush1.msra.mxu0 %v762
      %1207 = vmatprep.subr.mxu0 0.0
      %1208 = vmatpush1.msra.mxu0 0.0
      %1209 = vmatprep.subr.mxu0 0.0
      %1210 = vmatpush1.msra.mxu0 0.0
      %1211 = vmatprep.subr.mxu0 0.0
      %1212 = vmatpush1.msra.mxu0 0.0
      %1213 = vmatprep.subr.mxu0 0.0
      %1214 = vmatpush1.msra.mxu0 0.0
      %1215 = vmatprep.subr.mxu0 0.0
      %1216 = vmatpush1.msra.mxu0 0.0
      %1217 = vmatprep.subr.mxu0 0.0
      %1218 = vmatpush1.msra.mxu0 0.0
      %1219 = vmatprep.subr.mxu0 0.0
      %1220 = vmatpush1.msra.mxu0 0.0
      %1221 = vmatprep.subr.mxu0 0.0
      %1222 = vmatpush1.msra.mxu0 0.0
      %1223 = vmatprep.subr.mxu0 0.0
      %1224 = vmatpush1.msra.mxu0 0.0
      %1225 = vmatprep.subr.mxu0 0.0
      %1226 = vmatpush1.msra.mxu0 0.0
      %1227 = vmatprep.subr.mxu0 0.0
      %1228 = vmatpush1.msra.mxu0 0.0
      %1229 = vmatprep.subr.mxu0 0.0
      %1230 = vmatpush1.msra.mxu0 0.0
      %1231 = vmatprep.subr.mxu0 0.0
      %1232 = vmatpush1.msra.mxu0 0.0
      %1233 = vmatprep.subr.mxu0 0.0
      %1234 = vmatpush1.msra.mxu0 0.0
      %1235 = vmatprep.subr.mxu0 0.0
      %1236 = vmatpush1.msra.mxu0 0.0
      %1237 = vmatprep.subr.mxu0 0.0
      %1238 = vmatpush1.msra.mxu0 0.0
      %1239 = vmatprep.subr.mxu0 0.0
      %1240 = vmatpush1.msra.mxu0 0.0
      %1241 = vmatprep.subr.mxu0 0.0
      %1242 = vmatpush1.msra.mxu0 0.0
      %1243 = vmatprep.subr.mxu0 0.0
      %1244 = vmatpush1.msra.mxu0 0.0
      %1245 = vmatprep.subr.mxu0 0.0
      %1246 = vmatpush1.msra.mxu0 0.0
      %1247 = vmatprep.subr.mxu0 0.0
      %1248 = vmatpush1.msra.mxu0 0.0
      %1249 = vmatprep.subr.mxu0 0.0
      %1250 = vmatpush1.msra.mxu0 0.0
      %1251 = vmatprep.subr.mxu0 0.0
      %1252 = vmatpush1.msra.mxu0 0.0
      %1253 = vmatprep.subr.mxu0 0.0
      %1254 = vmatpush1.msra.mxu0 0.0
      %1255 = vmatprep.subr.mxu0 0.0
      %1256 = vmatpush1.msra.mxu0 0.0
      %1257 = vmatprep.subr.mxu0 0.0
      %1258 = vmatpush1.msra.mxu0 0.0
      %1259 = vmatprep.subr.mxu0 0.0
      %1260 = vmatpush1.msra.mxu0 0.0
      %1261 = vmatprep.subr.mxu0 0.0
      %1262 = vmatpush1.msra.mxu0 0.0
      %1263 = vmatprep.subr.mxu0 0.0
      %1264 = vmatpush1.msra.mxu0 0.0
      %1265 = vmatprep.subr.mxu0 0.0
      %1266 = vmatpush1.msra.mxu0 0.0
      %1267 = vmatprep.subr.mxu0 0.0
      %1268 = vmatpush1.msra.mxu0 0.0
      %1269 = vmatprep.mubr.f32.mxu0 0.0
      %1270 = vmatmul.mubr.f32.gmra.mrb[0].mxu0 %v783
      %v1271 = vpop.f32.mrb[0].mxu0
      %v1272 = vadd.f32 0.0, %v1271
      %v1273 = vpop.f32.mrb[0].mxu0
      %1274 = vdwg.mxu0
      %1275 = vmatprep.subr.mxu0 0.0
      %1276 = vmatpush1.msra.mxu0 %v767
      %1277 = vmatprep.subr.mxu0 0.0
      %1278 = vmatpush1.msra.mxu0 0.0
      %1279 = vmatprep.subr.mxu0 0.0
      %1280 = vmatpush1.msra.mxu0 0.0
      %1281 = vmatprep.subr.mxu0 0.0
      %1282 = vmatpush1.msra.mxu0 0.0
      %1283 = vmatprep.subr.mxu0 0.0
      %1284 = vmatpush1.msra.mxu0 0.0
      %1285 = vmatprep.subr.mxu0 0.0
      %1286 = vmatpush1.msra.mxu0 0.0
      %1287 = vmatprep.subr.mxu0 0.0
      %1288 = vmatpush1.msra.mxu0 0.0
      %1289 = vmatprep.subr.mxu0 0.0
      %1290 = vmatpush1.msra.mxu0 0.0
      %1291 = vmatprep.subr.mxu0 0.0
      %1292 = vmatpush1.msra.mxu0 0.0
      %1293 = vmatprep.subr.mxu0 0.0
      %1294 = vmatpush1.msra.mxu0 0.0
      %1295 = vmatprep.subr.mxu0 0.0
      %1296 = vmatpush1.msra.mxu0 0.0
      %1297 = vmatprep.subr.mxu0 0.0
      %1298 = vmatpush1.msra.mxu0 0.0
      %1299 = vmatprep.subr.mxu0 0.0
      %1300 = vmatpush1.msra.mxu0 0.0
      %1301 = vmatprep.subr.mxu0 0.0
      %1302 = vmatpush1.msra.mxu0 0.0
      %1303 = vmatprep.subr.mxu0 0.0
      %1304 = vmatpush1.msra.mxu0 0.0
      %1305 = vmatprep.subr.mxu0 0.0
      %1306 = vmatpush1.msra.mxu0 0.0
      %1307 = vmatprep.subr.mxu0 0.0
      %1308 = vmatpush1.msra.mxu0 0.0
      %1309 = vmatprep.subr.mxu0 0.0
      %1310 = vmatpush1.msra.mxu0 0.0
      %1311 = vmatprep.subr.mxu0 0.0
      %1312 = vmatpush1.msra.mxu0 0.0
      %1313 = vmatprep.subr.mxu0 0.0
      %1314 = vmatpush1.msra.mxu0 0.0
      %1315 = vmatprep.subr.mxu0 0.0
      %1316 = vmatpush1.msra.mxu0 0.0
      %1317 = vmatprep.subr.mxu0 0.0
      %1318 = vmatpush1.msra.mxu0 0.0
      %1319 = vmatprep.subr.mxu0 0.0
      %1320 = vmatpush1.msra.mxu0 0.0
      %1321 = vmatprep.subr.mxu0 0.0
      %1322 = vmatpush1.msra.mxu0 0.0
      %1323 = vmatprep.subr.mxu0 0.0
      %1324 = vmatpush1.msra.mxu0 0.0
      %1325 = vmatprep.subr.mxu0 0.0
      %1326 = vmatpush1.msra.mxu0 0.0
      %1327 = vmatprep.subr.mxu0 0.0
      %1328 = vmatpush1.msra.mxu0 0.0
      %1329 = vmatprep.subr.mxu0 0.0
      %1330 = vmatpush1.msra.mxu0 0.0
      %1331 = vmatprep.subr.mxu0 0.0
      %1332 = vmatpush1.msra.mxu0 0.0
      %1333 = vmatprep.subr.mxu0 0.0
      %1334 = vmatpush1.msra.mxu0 0.0
      %1335 = vmatprep.subr.mxu0 0.0
      %1336 = vmatpush1.msra.mxu0 0.0
      %1337 = vmatprep.subr.mxu0 0.0
      %1338 = vmatpush1.msra.mxu0 0.0
      %1339 = vmatprep.mubr.f32.mxu0 0.0
      %1340 = vmatmul.mubr.f32.gmra.mrb[0].mxu0 %v783
      %v1341 = vpop.f32.mrb[0].mxu0
      %v1342 = vadd.f32 0.0, %v1341
      %v1343 = vpop.f32.mrb[0].mxu0
      %1344 = vdwg.mxu0
      %v1345 = vmul.f32 %v852, %v780
      %v1346 = vmul.f32 %v922, %v780
      %v1347 = vmul.f32 %v992, %v780
      %v1348 = vmul.f32 %v1062, %v780
      %v1349 = vmul.f32 %v1132, %v780
      %v1350 = vmul.f32 %v1202, %v780
      %v1351 = vmul.f32 %v1272, %v780
      %v1352 = vmul.f32 %v1342, %v780
      %v1353 = vld [vmem:[%s5] sm:$0xff]
      %v1354 = vld [vmem:[%s5 + $0x8] sm:$0xff]
      %v1355 = vld [vmem:[%s6] sm:$0x1]
      %v1357 = vlaneseq
      %v1358 = vshrl.u32 %v1357, 7
      %v1359 = vsub.s32 0, %v1358
      %v1360 = vrot.slane %v1355, %v1359
      %vm1362 = vcmask 130048
      %v1364 = vsel %vm1362, %v1345, 0
      %v1367 = vsel %vm1362, %v1346, 0
      %v1370 = vsel %vm1362, %v1347, 0
      %v1373 = vsel %vm1362, %v1348, 0
      %v1376 = vsel %vm1362, %v1349, 0
      %v1379 = vsel %vm1362, %v1350, 0
      %v1382 = vsel %vm1362, %v1351, 0
      %v1385 = vsel %vm1362, %v1352, 0
      %1387 = vmatprep.subr.mxu0 0.0
      %1388 = vmatpush1.msra.mxu0 %v1353
      %1389 = vmatprep.subr.mxu0 0.0
      %1390 = vmatpush1.msra.mxu0 %v1354
      %1391 = vmatprep.subr.mxu0 0.0
      %1392 = vmatpush1.msra.mxu0 0.0
      %1393 = vmatprep.subr.mxu0 0.0
      %1394 = vmatpush1.msra.mxu0 0.0
      %1395 = vmatprep.subr.mxu0 0.0
      %1396 = vmatpush1.msra.mxu0 0.0
      %1397 = vmatprep.subr.mxu0 0.0
      %1398 = vmatpush1.msra.mxu0 0.0
      %1399 = vmatprep.subr.mxu0 0.0
      %1400 = vmatpush1.msra.mxu0 0.0
      %1401 = vmatprep.subr.mxu0 0.0
      %1402 = vmatpush1.msra.mxu0 0.0
      %1403 = vmatprep.subr.mxu0 0.0
      %1404 = vmatpush1.msra.mxu0 0.0
      %1405 = vmatprep.subr.mxu0 0.0
      %1406 = vmatpush1.msra.mxu0 0.0
      %1407 = vmatprep.subr.mxu0 0.0
      %1408 = vmatpush1.msra.mxu0 0.0
      %1409 = vmatprep.subr.mxu0 0.0
      %1410 = vmatpush1.msra.mxu0 0.0
      %1411 = vmatprep.subr.mxu0 0.0
      %1412 = vmatpush1.msra.mxu0 0.0
      %1413 = vmatprep.subr.mxu0 0.0
      %1414 = vmatpush1.msra.mxu0 0.0
      %1415 = vmatprep.subr.mxu0 0.0
      %1416 = vmatpush1.msra.mxu0 0.0
      %1417 = vmatprep.subr.mxu0 0.0
      %1418 = vmatpush1.msra.mxu0 0.0
      %1419 = vmatprep.subr.mxu0 0.0
      %1420 = vmatpush1.msra.mxu0 0.0
      %1421 = vmatprep.subr.mxu0 0.0
      %1422 = vmatpush1.msra.mxu0 0.0
      %1423 = vmatprep.subr.mxu0 0.0
      %1424 = vmatpush1.msra.mxu0 0.0
      %1425 = vmatprep.subr.mxu0 0.0
      %1426 = vmatpush1.msra.mxu0 0.0
      %1427 = vmatprep.subr.mxu0 0.0
      %1428 = vmatpush1.msra.mxu0 0.0
      %1429 = vmatprep.subr.mxu0 0.0
      %1430 = vmatpush1.msra.mxu0 0.0
      %1431 = vmatprep.subr.mxu0 0.0
      %1432 = vmatpush1.msra.mxu0 0.0
      %1433 = vmatprep.subr.mxu0 0.0
      %1434 = vmatpush1.msra.mxu0 0.0
      %1435 = vmatprep.subr.mxu0 0.0
      %1436 = vmatpush1.msra.mxu0 0.0
      %1437 = vmatprep.subr.mxu0 0.0
      %1438 = vmatpush1.msra.mxu0 0.0
      %1439 = vmatprep.subr.mxu0 0.0
      %1440 = vmatpush1.msra.mxu0 0.0
      %1441 = vmatprep.subr.mxu0 0.0
      %1442 = vmatpush1.msra.mxu0 0.0
      %1443 = vmatprep.subr.mxu0 0.0
      %1444 = vmatpush1.msra.mxu0 0.0
      %1445 = vmatprep.subr.mxu0 0.0
      %1446 = vmatpush1.msra.mxu0 0.0
      %1447 = vmatprep.subr.mxu0 0.0
      %1448 = vmatpush1.msra.mxu0 0.0
      %1449 = vmatprep.subr.mxu0 0.0
      %1450 = vmatpush1.msra.mxu0 0.0
      %1451 = vmatprep.mubr.f32.mxu0 0.0
      %1452 = vmatmul.mubr.f32.gmra.mrb[0].mxu0 %v1364
      %v1453 = vpop.f32.mrb[0].mxu0
      %v1454 = vadd.f32 %v1360, %v1453
      %v1455 = vpop.f32.mrb[0].mxu0
      %1456 = vmatprep.mubr.f32.mxu0 0.0
      %1457 = vmatmul.mubr.f32.gmra.mrb[0].mxu0 %v1367
      %v1458 = vpop.f32.mrb[0].mxu0
      %v1459 = vadd.f32 %v1360, %v1458
      %v1460 = vpop.f32.mrb[0].mxu0
      %1461 = vmatprep.mubr.f32.mxu0 0.0
      %1462 = vmatmul.mubr.f32.gmra.mrb[0].mxu0 %v1370
      %v1463 = vpop.f32.mrb[0].mxu0
      %v1464 = vadd.f32 %v1360, %v1463
      %v1465 = vpop.f32.mrb[0].mxu0
      %1466 = vmatprep.mubr.f32.mxu0 0.0
      %1467 = vmatmul.mubr.f32.gmra.mrb[0].mxu0 %v1373
      %v1468 = vpop.f32.mrb[0].mxu0
      %v1469 = vadd.f32 %v1360, %v1468
      %v1470 = vpop.f32.mrb[0].mxu0
      %1471 = vmatprep.mubr.f32.mxu0 0.0
      %1472 = vmatmul.mubr.f32.gmra.mrb[0].mxu0 %v1376
      %v1473 = vpop.f32.mrb[0].mxu0
      %v1474 = vadd.f32 %v1360, %v1473
      %v1475 = vpop.f32.mrb[0].mxu0
      %1476 = vmatprep.mubr.f32.mxu0 0.0
      %1477 = vmatmul.mubr.f32.gmra.mrb[0].mxu0 %v1379
      %v1478 = vpop.f32.mrb[0].mxu0
      %v1479 = vadd.f32 %v1360, %v1478
      %v1480 = vpop.f32.mrb[0].mxu0
      %1481 = vmatprep.mubr.f32.mxu0 0.0
      %1482 = vmatmul.mubr.f32.gmra.mrb[0].mxu0 %v1382
      %v1483 = vpop.f32.mrb[0].mxu0
      %v1484 = vadd.f32 %v1360, %v1483
      %v1485 = vpop.f32.mrb[0].mxu0
      %1486 = vmatprep.mubr.f32.mxu0 0.0
      %1487 = vmatmul.mubr.f32.gmra.mrb[0].mxu0 %v1385
      %v1488 = vpop.f32.mrb[0].mxu0
      %v1489 = vadd.f32 %v1360, %v1488
      %v1490 = vpop.f32.mrb[0].mxu0
      %1491 = vdwg.mxu0
      %v1492 = vmax.f32 %v1454, 0.0
      %v1493 = vmax.f32 %v1459, 0.0
      %v1494 = vmax.f32 %v1464, 0.0
      %v1495 = vmax.f32 %v1469, 0.0
      %v1496 = vmax.f32 %v1474, 0.0
      %v1497 = vmax.f32 %v1479, 0.0
      %v1498 = vmax.f32 %v1484, 0.0
      %v1499 = vmax.f32 %v1489, 0.0
      %v1500 = vld [vmem:[%s7] sm:$0xff]
      %v1501 = vld [vmem:[%s7 + $0x8] sm:$0xff]
      %v1502 = vld [vmem:[%s7 + $0x10] sm:$0xff]
      %v1503 = vld [vmem:[%s7 + $0x18] sm:$0xff]
      %v1504 = vld [vmem:[%s8] sm:$0x1]
      %v1506 = vlaneseq
      %v1507 = vshrl.u32 %v1506, 7
      %v1508 = vsub.s32 0, %v1507
      %v1509 = vrot.slane %v1504, %v1508
      %v1512 = vsel %vm640, %v1492, 0
      %v1515 = vsel %vm640, %v1493, 0
      %v1518 = vsel %vm640, %v1494, 0
      %v1521 = vsel %vm640, %v1495, 0
      %v1524 = vsel %vm640, %v1496, 0
      %v1527 = vsel %vm640, %v1497, 0
      %v1530 = vsel %vm640, %v1498, 0
      %v1533 = vsel %vm640, %v1499, 0
      %1535 = vmatprep.subr.mxu0 0.0
      %1536 = vmatpush1.msra.mxu0 %v1500
      %1537 = vmatprep.subr.mxu0 0.0
      %1538 = vmatpush1.msra.mxu0 %v1501
      %1539 = vmatprep.subr.mxu0 0.0
      %1540 = vmatpush1.msra.mxu0 %v1502
      %1541 = vmatprep.subr.mxu0 0.0
      %1542 = vmatpush1.msra.mxu0 %v1503
      %1543 = vmatprep.subr.mxu0 0.0
      %1544 = vmatpush1.msra.mxu0 0.0
      %1545 = vmatprep.subr.mxu0 0.0
      %1546 = vmatpush1.msra.mxu0 0.0
      %1547 = vmatprep.subr.mxu0 0.0
      %1548 = vmatpush1.msra.mxu0 0.0
      %1549 = vmatprep.subr.mxu0 0.0
      %1550 = vmatpush1.msra.mxu0 0.0
      %1551 = vmatprep.subr.mxu0 0.0
      %1552 = vmatpush1.msra.mxu0 0.0
      %1553 = vmatprep.subr.mxu0 0.0
      %1554 = vmatpush1.msra.mxu0 0.0
      %1555 = vmatprep.subr.mxu0 0.0
      %1556 = vmatpush1.msra.mxu0 0.0
      %1557 = vmatprep.subr.mxu0 0.0
      %1558 = vmatpush1.msra.mxu0 0.0
      %1559 = vmatprep.subr.mxu0 0.0
      %1560 = vmatpush1.msra.mxu0 0.0
      %1561 = vmatprep.subr.mxu0 0.0
      %1562 = vmatpush1.msra.mxu0 0.0
      %1563 = vmatprep.subr.mxu0 0.0
      %1564 = vmatpush1.msra.mxu0 0.0
      %1565 = vmatprep.subr.mxu0 0.0
      %1566 = vmatpush1.msra.mxu0 0.0
      %1567 = vmatprep.subr.mxu0 0.0
      %1568 = vmatpush1.msra.mxu0 0.0
      %1569 = vmatprep.subr.mxu0 0.0
      %1570 = vmatpush1.msra.mxu0 0.0
      %1571 = vmatprep.subr.mxu0 0.0
      %1572 = vmatpush1.msra.mxu0 0.0
      %1573 = vmatprep.subr.mxu0 0.0
      %1574 = vmatpush1.msra.mxu0 0.0
      %1575 = vmatprep.subr.mxu0 0.0
      %1576 = vmatpush1.msra.mxu0 0.0
      %1577 = vmatprep.subr.mxu0 0.0
      %1578 = vmatpush1.msra.mxu0 0.0
      %1579 = vmatprep.subr.mxu0 0.0
      %1580 = vmatpush1.msra.mxu0 0.0
      %1581 = vmatprep.subr.mxu0 0.0
      %1582 = vmatpush1.msra.mxu0 0.0
      %1583 = vmatprep.subr.mxu0 0.0
      %1584 = vmatpush1.msra.mxu0 0.0
      %1585 = vmatprep.subr.mxu0 0.0
      %1586 = vmatpush1.msra.mxu0 0.0
      %1587 = vmatprep.subr.mxu0 0.0
      %1588 = vmatpush1.msra.mxu0 0.0
      %1589 = vmatprep.subr.mxu0 0.0
      %1590 = vmatpush1.msra.mxu0 0.0
      %1591 = vmatprep.subr.mxu0 0.0
      %1592 = vmatpush1.msra.mxu0 0.0
      %1593 = vmatprep.subr.mxu0 0.0
      %1594 = vmatpush1.msra.mxu0 0.0
      %1595 = vmatprep.subr.mxu0 0.0
      %1596 = vmatpush1.msra.mxu0 0.0
      %1597 = vmatprep.subr.mxu0 0.0
      %1598 = vmatpush1.msra.mxu0 0.0
      %1599 = vmatprep.mubr.f32.mxu0 0.0
      %1600 = vmatmul.mubr.f32.gmra.mrb[0].mxu0 %v1512
      %v1601 = vpop.f32.mrb[0].mxu0
      %v1602 = vadd.f32 %v1509, %v1601
      %v1603 = vpop.f32.mrb[0].mxu0
      %1604 = vmatprep.mubr.f32.mxu0 0.0
      %1605 = vmatmul.mubr.f32.gmra.mrb[0].mxu0 %v1515
      %v1606 = vpop.f32.mrb[0].mxu0
      %v1607 = vadd.f32 %v1509, %v1606
      %v1608 = vpop.f32.mrb[0].mxu0
      %1609 = vmatprep.mubr.f32.mxu0 0.0
      %1610 = vmatmul.mubr.f32.gmra.mrb[0].mxu0 %v1518
      %v1611 = vpop.f32.mrb[0].mxu0
      %v1612 = vadd.f32 %v1509, %v1611
      %v1613 = vpop.f32.mrb[0].mxu0
      %1614 = vmatprep.mubr.f32.mxu0 0.0
      %1615 = vmatmul.mubr.f32.gmra.mrb[0].mxu0 %v1521
      %v1616 = vpop.f32.mrb[0].mxu0
      %v1617 = vadd.f32 %v1509, %v1616
      %v1618 = vpop.f32.mrb[0].mxu0
      %1619 = vmatprep.mubr.f32.mxu0 0.0
      %1620 = vmatmul.mubr.f32.gmra.mrb[0].mxu0 %v1524
      %v1621 = vpop.f32.mrb[0].mxu0
      %v1622 = vadd.f32 %v1509, %v1621
      %v1623 = vpop.f32.mrb[0].mxu0
      %1624 = vmatprep.mubr.f32.mxu0 0.0
      %1625 = vmatmul.mubr.f32.gmra.mrb[0].mxu0 %v1527
      %v1626 = vpop.f32.mrb[0].mxu0
      %v1627 = vadd.f32 %v1509, %v1626
      %v1628 = vpop.f32.mrb[0].mxu0
      %1629 = vmatprep.mubr.f32.mxu0 0.0
      %1630 = vmatmul.mubr.f32.gmra.mrb[0].mxu0 %v1530
      %v1631 = vpop.f32.mrb[0].mxu0
      %v1632 = vadd.f32 %v1509, %v1631
      %v1633 = vpop.f32.mrb[0].mxu0
      %1634 = vmatprep.mubr.f32.mxu0 0.0
      %1635 = vmatmul.mubr.f32.gmra.mrb[0].mxu0 %v1533
      %v1636 = vpop.f32.mrb[0].mxu0
      %v1637 = vadd.f32 %v1509, %v1636
      %v1638 = vpop.f32.mrb[0].mxu0
      %1639 = vdwg.mxu0
      %vm1640 = vcmask 1046528
      %v1641 = vrot.slane %v471, 1
      %v1642 = vrot.slane %v472, 1
      %v1643 = vsel %vm1640, %v1641, %v1642
      %v1644 = vrot.slane %v473, 1
      %v1645 = vsel %vm1640, %v1642, %v1644
      %v1646 = vrot.slane %v474, 1
      %v1647 = vsel %vm1640, %v1644, %v1646
      %v1648 = vrot.slane %v475, 1
      %v1649 = vsel %vm1640, %v1646, %v1648
      %v1650 = vrot.slane %v476, 1
      %v1651 = vsel %vm1640, %v1648, %v1650
      %v1652 = vrot.slane %v477, 1
      %v1653 = vsel %vm1640, %v1650, %v1652
      %v1654 = vrot.slane %v478, 1
      %v1655 = vsel %vm1640, %v1652, %v1654
      %v1658 = vsel %vm1640, %v1654, %v1641
      %v1659 = vld [vmem:[%s9] sm:$0xff]
      %v1660 = vld [vmem:[%s10] sm:$0xf]
      %v1661 = vsel %vm487, %v1643, 0
      %v1663 = vsel %vm487, %v1645, 0
      %v1665 = vsel %vm487, %v1647, 0
      %v1667 = vsel %vm487, %v1649, 0
      %v1669 = vsel %vm487, %v1651, 0
      %v1671 = vsel %vm487, %v1653, 0
      %v1673 = vsel %vm487, %v1655, 0
      %v1676 = vsel %vm487, %v1658, 0
      %v1679 = vsel %vm512, %v1660, 0
      %1681 = vmatprep.subr.mxu0 0.0
      %1682 = vmatpush1.msra.mxu0 %v1679
      %1683 = vmatprep.subr.mxu0 0.0
      %1684 = vmatpush1.msra.mxu0 0.0
      %1685 = vmatprep.subr.mxu0 0.0
      %1686 = vmatpush1.msra.mxu0 0.0
      %1687 = vmatprep.subr.mxu0 0.0
      %1688 = vmatpush1.msra.mxu0 0.0
      %1689 = vmatprep.subr.mxu0 0.0
      %1690 = vmatpush1.msra.mxu0 0.0
      %1691 = vmatprep.subr.mxu0 0.0
      %1692 = vmatpush1.msra.mxu0 0.0
      %1693 = vmatprep.subr.mxu0 0.0
      %1694 = vmatpush1.msra.mxu0 0.0
      %1695 = vmatprep.subr.mxu0 0.0
      %1696 = vmatpush1.msra.mxu0 0.0
      %1697 = vmatprep.subr.mxu0 0.0
      %1698 = vmatpush1.msra.mxu0 0.0
      %1699 = vmatprep.subr.mxu0 0.0
      %1700 = vmatpush1.msra.mxu0 0.0
      %1701 = vmatprep.subr.mxu0 0.0
      %1702 = vmatpush1.msra.mxu0 0.0
      %1703 = vmatprep.subr.mxu0 0.0
      %1704 = vmatpush1.msra.mxu0 0.0
      %1705 = vmatprep.subr.mxu0 0.0
      %1706 = vmatpush1.msra.mxu0 0.0
      %1707 = vmatprep.subr.mxu0 0.0
      %1708 = vmatpush1.msra.mxu0 0.0
      %1709 = vmatprep.subr.mxu0 0.0
      %1710 = vmatpush1.msra.mxu0 0.0
      %1711 = vmatprep.subr.mxu0 0.0
      %1712 = vmatpush1.msra.mxu0 0.0
      %1713 = vmatprep.subr.mxu0 0.0
      %1714 = vmatpush1.msra.mxu0 0.0
      %1715 = vmatprep.subr.mxu0 0.0
      %1716 = vmatpush1.msra.mxu0 0.0
      %1717 = vmatprep.subr.mxu0 0.0
      %1718 = vmatpush1.msra.mxu0 0.0
      %1719 = vmatprep.subr.mxu0 0.0
      %1720 = vmatpush1.msra.mxu0 0.0
      %1721 = vmatprep.subr.mxu0 0.0
      %1722 = vmatpush1.msra.mxu0 0.0
      %1723 = vmatprep.subr.mxu0 0.0
      %1724 = vmatpush1.msra.mxu0 0.0
      %1725 = vmatprep.subr.mxu0 0.0
      %1726 = vmatpush1.msra.mxu0 0.0
      %1727 = vmatprep.subr.mxu0 0.0
      %1728 = vmatpush1.msra.mxu0 0.0
      %1729 = vmatprep.subr.mxu0 0.0
      %1730 = vmatpush1.msra.mxu0 0.0
      %1731 = vmatprep.subr.mxu0 0.0
      %1732 = vmatpush1.msra.mxu0 0.0
      %1733 = vmatprep.subr.mxu0 0.0
      %1734 = vmatpush1.msra.mxu0 0.0
      %1735 = vmatprep.subr.mxu0 0.0
      %1736 = vmatpush1.msra.mxu0 0.0
      %1737 = vmatprep.subr.mxu0 0.0
      %1738 = vmatpush1.msra.mxu0 0.0
      %1739 = vmatprep.subr.mxu0 0.0
      %1740 = vmatpush1.msra.mxu0 0.0
      %1741 = vmatprep.subr.mxu0 0.0
      %1742 = vmatpush1.msra.mxu0 0.0
      %1743 = vmatprep.subr.mxu0 0.0
      %1744 = vmatpush1.msra.mxu0 0.0
      %1745 = vmatprep.mubr.f32.mxu0 0.0
      %1746 = vmatmul.mubr.f32.gmra.mrb[0].mxu0 %v1661
      %v1747 = vpop.f32.mrb[0].mxu0
      %v1748 = vadd.f32 0.0, %v1747
      %v1749 = vpop.f32.mrb[0].mxu0
      %1750 = vmatprep.mubr.f32.mxu0 0.0
      %1751 = vmatmul.mubr.f32.gmra.mrb[0].mxu0 %v1663
      %v1752 = vpop.f32.mrb[0].mxu0
      %v1753 = vadd.f32 0.0, %v1752
      %v1754 = vpop.f32.mrb[0].mxu0
      %1755 = vmatprep.mubr.f32.mxu0 0.0
      %1756 = vmatmul.mubr.f32.gmra.mrb[0].mxu0 %v1665
      %v1757 = vpop.f32.mrb[0].mxu0
      %v1758 = vadd.f32 0.0, %v1757
      %v1759 = vpop.f32.mrb[0].mxu0
      %1760 = vmatprep.mubr.f32.mxu0 0.0
      %1761 = vmatmul.mubr.f32.gmra.mrb[0].mxu0 %v1667
      %v1762 = vpop.f32.mrb[0].mxu0
      %v1763 = vadd.f32 0.0, %v1762
      %v1764 = vpop.f32.mrb[0].mxu0
      %1765 = vmatprep.mubr.f32.mxu0 0.0
      %1766 = vmatmul.mubr.f32.gmra.mrb[0].mxu0 %v1669
      %v1767 = vpop.f32.mrb[0].mxu0
      %v1768 = vadd.f32 0.0, %v1767
      %v1769 = vpop.f32.mrb[0].mxu0
      %1770 = vmatprep.mubr.f32.mxu0 0.0
      %1771 = vmatmul.mubr.f32.gmra.mrb[0].mxu0 %v1671
      %v1772 = vpop.f32.mrb[0].mxu0
      %v1773 = vadd.f32 0.0, %v1772
      %v1774 = vpop.f32.mrb[0].mxu0
      %1775 = vmatprep.mubr.f32.mxu0 0.0
      %1776 = vmatmul.mubr.f32.gmra.mrb[0].mxu0 %v1673
      %v1777 = vpop.f32.mrb[0].mxu0
      %v1778 = vadd.f32 0.0, %v1777
      %v1779 = vpop.f32.mrb[0].mxu0
      %1780 = vmatprep.mubr.f32.mxu0 0.0
      %1781 = vmatmul.mubr.f32.gmra.mrb[0].mxu0 %v1676
      %v1782 = vpop.f32.mrb[0].mxu0
      %v1783 = vadd.f32 0.0, %v1782
      %v1784 = vpop.f32.mrb[0].mxu0
      %1785 = vdwg.mxu0
      %v1787 = vsel %vm781, %v1602, 0
      %v1790 = vsel %vm781, %v1607, 0
      %v1793 = vsel %vm781, %v1612, 0
      %v1796 = vsel %vm781, %v1617, 0
      %v1799 = vsel %vm781, %v1622, 0
      %v1802 = vsel %vm781, %v1627, 0
      %v1805 = vsel %vm781, %v1632, 0
      %v1808 = vsel %vm781, %v1637, 0
      %1810 = vmatprep.subr.mxu0 0.0
      %1811 = vmatpush1.msra.mxu0 %v1659
      %1812 = vmatprep.subr.mxu0 0.0
      %1813 = vmatpush1.msra.mxu0 0.0
      %1814 = vmatprep.subr.mxu0 0.0
      %1815 = vmatpush1.msra.mxu0 0.0
      %1816 = vmatprep.subr.mxu0 0.0
      %1817 = vmatpush1.msra.mxu0 0.0
      %1818 = vmatprep.subr.mxu0 0.0
      %1819 = vmatpush1.msra.mxu0 0.0
      %1820 = vmatprep.subr.mxu0 0.0
      %1821 = vmatpush1.msra.mxu0 0.0
      %1822 = vmatprep.subr.mxu0 0.0
      %1823 = vmatpush1.msra.mxu0 0.0
      %1824 = vmatprep.subr.mxu0 0.0
      %1825 = vmatpush1.msra.mxu0 0.0
      %1826 = vmatprep.subr.mxu0 0.0
      %1827 = vmatpush1.msra.mxu0 0.0
      %1828 = vmatprep.subr.mxu0 0.0
      %1829 = vmatpush1.msra.mxu0 0.0
      %1830 = vmatprep.subr.mxu0 0.0
      %1831 = vmatpush1.msra.mxu0 0.0
      %1832 = vmatprep.subr.mxu0 0.0
      %1833 = vmatpush1.msra.mxu0 0.0
      %1834 = vmatprep.subr.mxu0 0.0
      %1835 = vmatpush1.msra.mxu0 0.0
      %1836 = vmatprep.subr.mxu0 0.0
      %1837 = vmatpush1.msra.mxu0 0.0
      %1838 = vmatprep.subr.mxu0 0.0
      %1839 = vmatpush1.msra.mxu0 0.0
      %1840 = vmatprep.subr.mxu0 0.0
      %1841 = vmatpush1.msra.mxu0 0.0
      %1842 = vmatprep.subr.mxu0 0.0
      %1843 = vmatpush1.msra.mxu0 0.0
      %1844 = vmatprep.subr.mxu0 0.0
      %1845 = vmatpush1.msra.mxu0 0.0
      %1846 = vmatprep.subr.mxu0 0.0
      %1847 = vmatpush1.msra.mxu0 0.0
      %1848 = vmatprep.subr.mxu0 0.0
      %1849 = vmatpush1.msra.mxu0 0.0
      %1850 = vmatprep.subr.mxu0 0.0
      %1851 = vmatpush1.msra.mxu0 0.0
      %1852 = vmatprep.subr.mxu0 0.0
      %1853 = vmatpush1.msra.mxu0 0.0
      %1854 = vmatprep.subr.mxu0 0.0
      %1855 = vmatpush1.msra.mxu0 0.0
      %1856 = vmatprep.subr.mxu0 0.0
      %1857 = vmatpush1.msra.mxu0 0.0
      %1858 = vmatprep.subr.mxu0 0.0
      %1859 = vmatpush1.msra.mxu0 0.0
      %1860 = vmatprep.subr.mxu0 0.0
      %1861 = vmatpush1.msra.mxu0 0.0
      %1862 = vmatprep.subr.mxu0 0.0
      %1863 = vmatpush1.msra.mxu0 0.0
      %1864 = vmatprep.subr.mxu0 0.0
      %1865 = vmatpush1.msra.mxu0 0.0
      %1866 = vmatprep.subr.mxu0 0.0
      %1867 = vmatpush1.msra.mxu0 0.0
      %1868 = vmatprep.subr.mxu0 0.0
      %1869 = vmatpush1.msra.mxu0 0.0
      %1870 = vmatprep.subr.mxu0 0.0
      %1871 = vmatpush1.msra.mxu0 0.0
      %1872 = vmatprep.subr.mxu0 0.0
      %1873 = vmatpush1.msra.mxu0 0.0
      %1874 = vmatprep.mubr.f32.mxu0 0.0
      %1875 = vmatmul.mubr.f32.gmra.mrb[0].mxu0 %v1787
      %v1876 = vpop.f32.mrb[0].mxu0
      %v1877 = vadd.f32 %v1748, %v1876
      %v1878 = vpop.f32.mrb[0].mxu0
      %1879 = vmatprep.mubr.f32.mxu0 0.0
      %1880 = vmatmul.mubr.f32.gmra.mrb[0].mxu0 %v1790
      %v1881 = vpop.f32.mrb[0].mxu0
      %v1882 = vadd.f32 %v1753, %v1881
      %v1883 = vpop.f32.mrb[0].mxu0
      %1884 = vmatprep.mubr.f32.mxu0 0.0
      %1885 = vmatmul.mubr.f32.gmra.mrb[0].mxu0 %v1793
      %v1886 = vpop.f32.mrb[0].mxu0
      %v1887 = vadd.f32 %v1758, %v1886
      %v1888 = vpop.f32.mrb[0].mxu0
      %1889 = vmatprep.mubr.f32.mxu0 0.0
      %1890 = vmatmul.mubr.f32.gmra.mrb[0].mxu0 %v1796
      %v1891 = vpop.f32.mrb[0].mxu0
      %v1892 = vadd.f32 %v1763, %v1891
      %v1893 = vpop.f32.mrb[0].mxu0
      %1894 = vmatprep.mubr.f32.mxu0 0.0
      %1895 = vmatmul.mubr.f32.gmra.mrb[0].mxu0 %v1799
      %v1896 = vpop.f32.mrb[0].mxu0
      %v1897 = vadd.f32 %v1768, %v1896
      %v1898 = vpop.f32.mrb[0].mxu0
      %1899 = vmatprep.mubr.f32.mxu0 0.0
      %1900 = vmatmul.mubr.f32.gmra.mrb[0].mxu0 %v1802
      %v1901 = vpop.f32.mrb[0].mxu0
      %v1902 = vadd.f32 %v1773, %v1901
      %v1903 = vpop.f32.mrb[0].mxu0
      %1904 = vmatprep.mubr.f32.mxu0 0.0
      %1905 = vmatmul.mubr.f32.gmra.mrb[0].mxu0 %v1805
      %v1906 = vpop.f32.mrb[0].mxu0
      %v1907 = vadd.f32 %v1778, %v1906
      %v1908 = vpop.f32.mrb[0].mxu0
      %1909 = vmatprep.mubr.f32.mxu0 0.0
      %1910 = vmatmul.mubr.f32.gmra.mrb[0].mxu0 %v1808
      %v1911 = vpop.f32.mrb[0].mxu0
      %v1912 = vadd.f32 %v1783, %v1911
      %v1913 = vpop.f32.mrb[0].mxu0
      %1914 = vdwg.mxu0
      %v1915 = vld [vmem:[%s11] sm:$0x1]
      %v1917 = vlaneseq
      %v1918 = vshrl.u32 %v1917, 7
      %v1919 = vsub.s32 0, %v1918
      %v1920 = vrot.slane %v1915, %v1919
      %v1922 = vadd.f32 %v1877, %v1920
      %v1923 = vadd.f32 %v1882, %v1920
      %v1924 = vadd.f32 %v1887, %v1920
      %v1925 = vadd.f32 %v1892, %v1920
      %v1926 = vadd.f32 %v1897, %v1920
      %v1927 = vadd.f32 %v1902, %v1920
      %v1928 = vadd.f32 %v1907, %v1920
      %v1929 = vadd.f32 %v1912, %v1920
      %v1930 = vmax.f32 %v1922, 0.0
      %v1931 = vmax.f32 %v1923, 0.0
      %v1932 = vmax.f32 %v1924, 0.0
      %v1933 = vmax.f32 %v1925, 0.0
      %v1934 = vmax.f32 %v1926, 0.0
      %v1935 = vmax.f32 %v1927, 0.0
      %v1936 = vmax.f32 %v1928, 0.0
      %v1937 = vmax.f32 %v1929, 0.0
      %v1938 = vld [vmem:[%s12] sm:$0xff]
      %v1939 = vld [vmem:[%s12 + $0x8] sm:$0xff]
      %v1940 = vld [vmem:[%s12 + $0x10] sm:$0xff]
      %v1941 = vld [vmem:[%s12 + $0x18] sm:$0xff]
      %v1942 = vld [vmem:[%s13] sm:$0x1]
      %v1944 = vlaneseq
      %v1945 = vshrl.u32 %v1944, 7
      %v1946 = vsub.s32 0, %v1945
      %v1947 = vrot.slane %v1942, %v1946
      %v1950 = vsel %vm640, %v1930, 0
      %v1953 = vsel %vm640, %v1931, 0
      %v1956 = vsel %vm640, %v1932, 0
      %v1959 = vsel %vm640, %v1933, 0
      %v1962 = vsel %vm640, %v1934, 0
      %v1965 = vsel %vm640, %v1935, 0
      %v1968 = vsel %vm640, %v1936, 0
      %v1971 = vsel %vm640, %v1937, 0
      %1973 = vmatprep.subr.mxu0 0.0
      %1974 = vmatpush1.msra.mxu0 %v1938
      %1975 = vmatprep.subr.mxu0 0.0
      %1976 = vmatpush1.msra.mxu0 %v1939
      %1977 = vmatprep.subr.mxu0 0.0
      %1978 = vmatpush1.msra.mxu0 %v1940
      %1979 = vmatprep.subr.mxu0 0.0
      %1980 = vmatpush1.msra.mxu0 %v1941
      %1981 = vmatprep.subr.mxu0 0.0
      %1982 = vmatpush1.msra.mxu0 0.0
      %1983 = vmatprep.subr.mxu0 0.0
      %1984 = vmatpush1.msra.mxu0 0.0
      %1985 = vmatprep.subr.mxu0 0.0
      %1986 = vmatpush1.msra.mxu0 0.0
      %1987 = vmatprep.subr.mxu0 0.0
      %1988 = vmatpush1.msra.mxu0 0.0
      %1989 = vmatprep.subr.mxu0 0.0
      %1990 = vmatpush1.msra.mxu0 0.0
      %1991 = vmatprep.subr.mxu0 0.0
      %1992 = vmatpush1.msra.mxu0 0.0
      %1993 = vmatprep.subr.mxu0 0.0
      %1994 = vmatpush1.msra.mxu0 0.0
      %1995 = vmatprep.subr.mxu0 0.0
      %1996 = vmatpush1.msra.mxu0 0.0
      %1997 = vmatprep.subr.mxu0 0.0
      %1998 = vmatpush1.msra.mxu0 0.0
      %1999 = vmatprep.subr.mxu0 0.0
      %2000 = vmatpush1.msra.mxu0 0.0
      %2001 = vmatprep.subr.mxu0 0.0
      %2002 = vmatpush1.msra.mxu0 0.0
      %2003 = vmatprep.subr.mxu0 0.0
      %2004 = vmatpush1.msra.mxu0 0.0
      %2005 = vmatprep.subr.mxu0 0.0
      %2006 = vmatpush1.msra.mxu0 0.0
      %2007 = vmatprep.subr.mxu0 0.0
      %2008 = vmatpush1.msra.mxu0 0.0
      %2009 = vmatprep.subr.mxu0 0.0
      %2010 = vmatpush1.msra.mxu0 0.0
      %2011 = vmatprep.subr.mxu0 0.0
      %2012 = vmatpush1.msra.mxu0 0.0
      %2013 = vmatprep.subr.mxu0 0.0
      %2014 = vmatpush1.msra.mxu0 0.0
      %2015 = vmatprep.subr.mxu0 0.0
      %2016 = vmatpush1.msra.mxu0 0.0
      %2017 = vmatprep.subr.mxu0 0.0
      %2018 = vmatpush1.msra.mxu0 0.0
      %2019 = vmatprep.subr.mxu0 0.0
      %2020 = vmatpush1.msra.mxu0 0.0
      %2021 = vmatprep.subr.mxu0 0.0
      %2022 = vmatpush1.msra.mxu0 0.0
      %2023 = vmatprep.subr.mxu0 0.0
      %2024 = vmatpush1.msra.mxu0 0.0
      %2025 = vmatprep.subr.mxu0 0.0
      %2026 = vmatpush1.msra.mxu0 0.0
      %2027 = vmatprep.subr.mxu0 0.0
      %2028 = vmatpush1.msra.mxu0 0.0
      %2029 = vmatprep.subr.mxu0 0.0
      %2030 = vmatpush1.msra.mxu0 0.0
      %2031 = vmatprep.subr.mxu0 0.0
      %2032 = vmatpush1.msra.mxu0 0.0
      %2033 = vmatprep.subr.mxu0 0.0
      %2034 = vmatpush1.msra.mxu0 0.0
      %2035 = vmatprep.subr.mxu0 0.0
      %2036 = vmatpush1.msra.mxu0 0.0
      %2037 = vmatprep.mubr.f32.mxu0 0.0
      %2038 = vmatmul.mubr.f32.gmra.mrb[0].mxu0 %v1950
      %v2039 = vpop.f32.mrb[0].mxu0
      %v2040 = vadd.f32 %v1947, %v2039
      %v2041 = vpop.f32.mrb[0].mxu0
      %2042 = vmatprep.mubr.f32.mxu0 0.0
      %2043 = vmatmul.mubr.f32.gmra.mrb[0].mxu0 %v1953
      %v2044 = vpop.f32.mrb[0].mxu0
      %v2045 = vadd.f32 %v1947, %v2044
      %v2046 = vpop.f32.mrb[0].mxu0
      %2047 = vmatprep.mubr.f32.mxu0 0.0
      %2048 = vmatmul.mubr.f32.gmra.mrb[0].mxu0 %v1956
      %v2049 = vpop.f32.mrb[0].mxu0
      %v2050 = vadd.f32 %v1947, %v2049
      %v2051 = vpop.f32.mrb[0].mxu0
      %2052 = vmatprep.mubr.f32.mxu0 0.0
      %2053 = vmatmul.mubr.f32.gmra.mrb[0].mxu0 %v1959
      %v2054 = vpop.f32.mrb[0].mxu0
      %v2055 = vadd.f32 %v1947, %v2054
      %v2056 = vpop.f32.mrb[0].mxu0
      %2057 = vmatprep.mubr.f32.mxu0 0.0
      %2058 = vmatmul.mubr.f32.gmra.mrb[0].mxu0 %v1962
      %v2059 = vpop.f32.mrb[0].mxu0
      %v2060 = vadd.f32 %v1947, %v2059
      %v2061 = vpop.f32.mrb[0].mxu0
      %2062 = vmatprep.mubr.f32.mxu0 0.0
      %2063 = vmatmul.mubr.f32.gmra.mrb[0].mxu0 %v1965
      %v2064 = vpop.f32.mrb[0].mxu0
      %v2065 = vadd.f32 %v1947, %v2064
      %v2066 = vpop.f32.mrb[0].mxu0
      %2067 = vmatprep.mubr.f32.mxu0 0.0
      %2068 = vmatmul.mubr.f32.gmra.mrb[0].mxu0 %v1968
      %v2069 = vpop.f32.mrb[0].mxu0
      %v2070 = vadd.f32 %v1947, %v2069
      %v2071 = vpop.f32.mrb[0].mxu0
      %2072 = vmatprep.mubr.f32.mxu0 0.0
      %2073 = vmatmul.mubr.f32.gmra.mrb[0].mxu0 %v1971
      %v2074 = vpop.f32.mrb[0].mxu0
      %v2075 = vadd.f32 %v1947, %v2074
      %v2076 = vpop.f32.mrb[0].mxu0
      %2077 = vdwg.mxu0
      %2078 = vst.msk [vmem:[%s469] sm:$0xff] %vm487, %v2040
      %2079 = vst.msk [vmem:[%s469 + $0x8] sm:$0xff] %vm487, %v2045
      %2080 = vst.msk [vmem:[%s469 + $0x10] sm:$0xff] %vm487, %v2050
      %2081 = vst.msk [vmem:[%s469 + $0x18] sm:$0xff] %vm487, %v2055
      %2082 = vst.msk [vmem:[%s469 + $0x20] sm:$0xff] %vm487, %v2060
      %2083 = vst.msk [vmem:[%s469 + $0x28] sm:$0xff] %vm487, %v2065
      %2084 = vst.msk [vmem:[%s469 + $0x30] sm:$0xff] %vm487, %v2070
      %2085 = vst.msk [vmem:[%s469 + $0x38] sm:$0xff] %vm487, %v2075
      %s2086 = smul.u32 8, %s25
      %p2087 = scmp.lt.s32.totalorder %s2086, 15
      %s2088 = scalar_select %p2087, %s2086, 15
      %s2089 = smul.addr %s2088, 8
      %s2090 = scalar_lea.vmem %s14, %s2089
      // Predicated region
      $region77: #{tpu_custom_call.1} parent=75 // pred_check
        %p2091 = pneg %p342
      $region78: #{tpu_custom_call.1} parent=75 // pred_check_branch
        %2093 = sbr.rel (%p2091) target = $region80
      $region79: #{tpu_custom_call.1} parent=75 // pred_region
        %s2094 = smul.u32 8, %s25
      $region80: #{tpu_custom_call.1} parent=75 // pred_fallthru
        _
    $region76: #{tpu_custom_call.1} parent=5 // pred_fallthru
      _
    %p2095 = scmp.le.s32.totalorder 2, %s20
    // Predicated region
    $region81: #{tpu_custom_call.1} parent=5 // pred_check
      %p2096 = pneg %p2095
    $region82: #{tpu_custom_call.1} parent=5 // pred_check_branch
      %2098 = sbr.rel (%p2096) target = $region84
    $region83: #{tpu_custom_call.1} parent=5 // pred_region
      %s2099 = ssub.s32 %s20, 2
      // Predicated region
      $region85: #{tpu_custom_call.1} parent=83 // pred_check
        %p2100 = pneg %p348
      $region86: #{tpu_custom_call.1} parent=83 // pred_check_branch
        %2102 = sbr.rel (%p2100) target = $region88
      $region87: #{tpu_custom_call.1} parent=83 // pred_region
        %s2103 = smul.u32 8, %s26
        %p2104 = scmp.lt.s32.totalorder %s2103, 15
        %s2105 = scalar_select %p2104, %s2103, 15
        %s2106 = smul.addr %s2105, 8
        %s2107 = scalar_lea.vmem %s14, %s2106
      $region88: #{tpu_custom_call.1} parent=83 // pred_fallthru
        _
    $region84: #{tpu_custom_call.1} parent=5 // pred_fallthru
      _
  $region6: #{tpu_custom_call.1} parent=0 // loop_footer
    %s24 = sadd.s32 1, %s20
  $region7: #{tpu_custom_call.1} parent=0 // loop_footer_branch
    %19 = sbr.rel target = $region3
  $region8: #{tpu_custom_call.1} parent=0 // loop_exit
    _

</llo_original>
